<compile_context>
chip_gen: v5e
topology: v5e:2x2
jax: 0.10.0
libtpu: 0.0.40
codegen_flags: <defaults>
</compile_context>

<pallas_src>
import functools

import jax
import jax.numpy as jnp
from jax.experimental import pallas as pl
from jax.experimental.pallas import tpu as pltpu


def _mish(v):
    # exact mish(x) = x * tanh(softplus(x)); numerically stable softplus.
    sp = jnp.maximum(v, 0.0) + jnp.log(1.0 + jnp.exp(-jnp.abs(v)))
    return v * jnp.tanh(sp)


def _kernel(x_ref, t_ref, w1_ref, b1_ref, g1_ref, be1_ref,
            w2_ref, b2_ref, g2_ref, be2_ref,
            wt_ref, bt_ref, wr_ref, br_ref,
            o_ref, halo_ref,
            *, H, Cin, Cout, ks, pad, n_groups):
    """One batch element per grid step, NCH layout ([C, H] tiles)."""
    b = pl.program_id(0)
    eps = 1e-5
    group_size = Cout // n_groups
    hi_prec = jax.lax.Precision.HIGHEST

    # Zero the halo buffer every step (halo lanes stay zero; must not rely on
    # step 0 only — with "parallel" semantics each core has its own scratch).
    halo_ref[...] = jnp.zeros_like(halo_ref)

    xv = x_ref[0]                                            # [Cin, H]

    if group_size > 1:
        # one-hot "same group" selector built in-kernel (general path; the
        # shipped config has group_size == 1 and skips it).
        cid = jax.lax.broadcasted_iota(jnp.int32, (Cout, Cout), 0) // group_size
        gid = jax.lax.broadcasted_iota(jnp.int32, (Cout, Cout), 1) // group_size
        gsel = (cid == gid).astype(jnp.float32)

    def group_reduce(s):                                     # s: [Cout, 1]
        if group_size == 1:
            return s
        return jnp.dot(gsel, s, preferred_element_type=jnp.float32,
                       precision=hi_prec)

    def groupnorm(h, gamma, beta):                           # h: [Cout, H]
        n = float(H * group_size)
        mean = group_reduce(jnp.sum(h, axis=1, keepdims=True)) / n
        d = h - mean
        var = group_reduce(jnp.sum(d * d, axis=1, keepdims=True)) / n
        return d / jnp.sqrt(var + eps) * gamma + beta

    def conv_same(src, c_in, w_ref, b_col):                  # src: [c_in, H]
        # 'same'-padded conv1d as ks k-accumulated MXU dots.  Source staged
        # once into the (pre-zeroed-halo) buffer; each tap is a static
        # lane-offset window read — no im2col, no reshapes.
        halo_ref[0:c_in, pad:pad + H] = src
        acc = jnp.zeros((Cout, H), jnp.float32)
        for k in range(ks):
            win = halo_ref[0:c_in, k:k + H]                  # [c_in, H]
            acc = acc + jnp.dot(w_ref[k], win,
                                preferred_element_type=jnp.float32,
                                precision=hi_prec)
        return acc + b_col                                   # [Cout, H]

    # ---- time_mlp: Mish -> Linear, as a per-channel column [Cout, 1] -------
    t_row = t_ref[pl.ds(b, 1), :]                            # [1, E]
    te = jnp.sum(wt_ref[...] * _mish(t_row), axis=1, keepdims=True) + bt_ref[...]

    # ---- blocks[0]: LoRA-merged conv -> GroupNorm -> Mish, + time embed ----
    h1 = conv_same(xv, Cin, w1_ref, b1_ref[...])
    h1 = _mish(groupnorm(h1, g1_ref[...], be1_ref[...])) + te

    # ---- blocks[1]: conv -> GroupNorm -> Mish (h1 stays a value) -----------
    h2 = conv_same(h1, Cout, w2_ref, b2_ref[...])
    h2 = _mish(groupnorm(h2, g2_ref[...], be2_ref[...]))

    # ---- residual: LoRA-merged 1x1 conv on the original input --------------
    res = jnp.dot(wr_ref[...], xv, preferred_element_type=jnp.float32,
                  precision=hi_prec) + br_ref[...]

    o_ref[0] = (h2 + res).astype(o_ref.dtype)


def lora_residual_temporal_block(x, t, kparams, *, kernel_size=5, n_groups=8):
    """x: [B, Cin, H] (PyTorch NCH), t: [B, E].  Returns [B, Cout, H]."""
    B, Cin, H = x.shape
    ks = kernel_size
    pad = ks // 2
    (w1, b1, g1, be1, w2, b2, g2, be2, wt, bt, wr, br) = kparams
    Cout = w1.shape[1]
    Cmax = max(Cin, Cout)

    kern = functools.partial(_kernel, H=H, Cin=Cin, Cout=Cout,
                             ks=ks, pad=pad, n_groups=n_groups)

    def const_spec(arr):
        zeros = (0,) * arr.ndim
        return pl.BlockSpec(arr.shape, lambda b_, z=zeros: z)

    in_specs = [
        pl.BlockSpec((1, Cin, H), lambda b_: (b_, 0, 0)),    # x: tiled over batch
        const_spec(t),                                       # t: resident
        const_spec(w1), const_spec(b1), const_spec(g1), const_spec(be1),
        const_spec(w2), const_spec(b2), const_spec(g2), const_spec(be2),
        const_spec(wt), const_spec(bt), const_spec(wr), const_spec(br),
    ]

    out = pl.pallas_call(
        kern,
        out_shape=jax.ShapeDtypeStruct((B, Cout, H), jnp.float32),
        grid=(B,),
        in_specs=in_specs,
        out_specs=pl.BlockSpec((1, Cout, H), lambda b_: (b_, 0, 0)),
        scratch_shapes=[pltpu.VMEM((Cmax, H + 2 * pad), jnp.float32)],
        compiler_params=pltpu.CompilerParams(
            dimension_semantics=("parallel",)),
    )(x, t, w1, b1, g1, be1, w2, b2, g2, be2, wt, bt, wr, br)
    return out


def make_params(key, Cin, Cout, E, r, ks, lora_alpha=1.0):
    """Deterministic synthetic parameters, LoRA merged for the chosen task.

    LoRAConv1d(conv, r) is realized as W_eff = W + (alpha/r) * (B @ A)
    reshaped to the conv weight shape (host-side merge; mathematically
    identical to base conv + LoRA branch for the selected task).
    """
    keys = jax.random.split(key, 16)

    def rnd(k, shape, scale=0.1):
        return scale * jax.random.normal(k, shape, dtype=jnp.float32)

    scaling = lora_alpha / r

    # blocks[0]: LoRAConv1d(Conv1d(Cin, Cout, ks)) -> GroupNorm -> Mish
    w1_base = rnd(keys[0], (Cout, Cin, ks))
    b1 = rnd(keys[1], (Cout,))
    lora_A1 = rnd(keys[2], (r, Cin * ks))
    lora_B1 = rnd(keys[3], (Cout, r))
    w1_eff = w1_base + scaling * (lora_B1 @ lora_A1).reshape(Cout, Cin, ks)
    g1 = 1.0 + rnd(keys[4], (Cout,))
    be1 = rnd(keys[5], (Cout,))

    # blocks[1]: Conv1dBlock(Cout, Cout, ks)
    w2 = rnd(keys[6], (Cout, Cout, ks))
    b2 = rnd(keys[7], (Cout,))
    g2 = 1.0 + rnd(keys[8], (Cout,))
    be2 = rnd(keys[9], (Cout,))

    # time_mlp: Mish -> Linear(E, Cout)
    wt = rnd(keys[10], (Cout, E))
    bt = rnd(keys[11], (Cout,))

    # residual_conv: LoRAConv1d(Conv1d(Cin, Cout, 1))
    wr_base = rnd(keys[12], (Cout, Cin, 1))
    br = rnd(keys[13], (Cout,))
    lora_Ar = rnd(keys[14], (r, Cin))
    lora_Br = rnd(keys[15], (Cout, r))
    wr_eff = wr_base + scaling * (lora_Br @ lora_Ar).reshape(Cout, Cin, 1)

    col = lambda v: v.reshape(Cout, 1)
    return (
        jnp.transpose(w1_eff, (2, 0, 1)),   # [ks, Cout, Cin]
        col(b1), col(g1), col(be1),
        jnp.transpose(w2, (2, 0, 1)),       # [ks, Cout, Cout]
        col(b2), col(g2), col(be2),
        wt,                                  # [Cout, E]
        col(bt),
        wr_eff[:, :, 0],                     # [Cout, Cin]
        col(br),
    )


def _reference(x, t, kparams, *, ks, n_groups):
    """Pure-JAX reference with identical (merged-LoRA) semantics, NCH layout."""
    (w1, b1, g1, be1, w2, b2, g2, be2, wt, bt, wr, br) = kparams
    B, Cin, H = x.shape
    pad = ks // 2
    Cout = w1.shape[1]
    hi = jax.lax.Precision.HIGHEST

    def conv(xin, w, b):                     # xin [B, C, H], w [ks, Cout, C]
        xp = jnp.pad(xin, ((0, 0), (0, 0), (pad, pad)))
        out = sum(jnp.einsum('oc,bch->boh', w[k], xp[:, :, k:k + H], precision=hi)
                  for k in range(ks))
        return out + b.reshape(1, Cout, 1)

    def gn(h, gamma, beta):
        g = Cout // n_groups
        hg = h.reshape(B, n_groups, g, H)
        mean = hg.mean(axis=(2, 3), keepdims=True)
        var = ((hg - mean) ** 2).mean(axis=(2, 3), keepdims=True)
        hn = ((hg - mean) / jnp.sqrt(var + 1e-5)).reshape(B, Cout, H)
        return hn * gamma.reshape(1, Cout, 1) + beta.reshape(1, Cout, 1)

    def mish(v):
        return v * jnp.tanh(jax.nn.softplus(v))

    te = mish(t) @ wt.T + bt.reshape(1, Cout)                 # [B, Cout]
    h1 = mish(gn(conv(x, w1, b1), g1, be1)) + te[:, :, None]
    h2 = mish(gn(conv(h1, w2, b2), g2, be2))
    res = jnp.einsum('oc,bch->boh', wr, x, precision=hi) + br.reshape(1, Cout, 1)
    return h2 + res                                           # [B, Cout, H]


if __name__ == "__main__":
    # shapes implied by the module: x [B, inp_channels, horizon], t [B, embed_dim]
    B, Cin, Cout, H, E, r, ks, G = 2, 4, 8, 16, 32, 4, 5, 8

    key = jax.random.PRNGKey(0)
    k_x, k_t, k_p = jax.random.split(key, 3)
    x = jax.random.normal(k_x, (B, Cin, H), dtype=jnp.float32)
    t = jax.random.normal(k_t, (B, E), dtype=jnp.float32)

    # Deterministic synthetic params for the chosen task ("task_0"): LoRA
    # adapters merged into the conv weights host-side (exact equivalent).
    kparams = make_params(k_p, Cin, Cout, E, r, ks)

    out = lora_residual_temporal_block(x, t, kparams, kernel_size=ks, n_groups=G)
    out = jax.block_until_ready(out)

    assert out.shape == (B, Cout, H), out.shape

    ref = _reference(x, t, kparams, ks=ks, n_groups=G)
    err = float(jnp.max(jnp.abs(out - ref)))
    assert err < 5e-3, f"max abs err vs reference: {err}"

    print("KERNEL_OK")
</pallas_src>

<mosaic_0001>
module attributes {stable_mosaic.version = 11 : i64} {
  func.func @_kernel(%arg0: i32, %arg1: memref<1x4x16xf32, #tpu.memory_space<vmem>>, %arg2: memref<2x32xf32, #tpu.memory_space<vmem>>, %arg3: memref<5x8x4xf32, #tpu.memory_space<vmem>>, %arg4: memref<8x1xf32, #tpu.memory_space<vmem>>, %arg5: memref<8x1xf32, #tpu.memory_space<vmem>>, %arg6: memref<8x1xf32, #tpu.memory_space<vmem>>, %arg7: memref<5x8x8xf32, #tpu.memory_space<vmem>>, %arg8: memref<8x1xf32, #tpu.memory_space<vmem>>, %arg9: memref<8x1xf32, #tpu.memory_space<vmem>>, %arg10: memref<8x1xf32, #tpu.memory_space<vmem>>, %arg11: memref<8x32xf32, #tpu.memory_space<vmem>>, %arg12: memref<8x1xf32, #tpu.memory_space<vmem>>, %arg13: memref<8x4xf32, #tpu.memory_space<vmem>>, %arg14: memref<8x1xf32, #tpu.memory_space<vmem>>, %arg15: memref<1x8x16xf32, #tpu.memory_space<vmem>>, %arg16: memref<8x20xf32, #tpu.memory_space<vmem>>) attributes {dimension_semantics = [#tpu.dimension_semantics<parallel>], iteration_bounds = array<i64: 2>, scalar_prefetch = 0 : i64, scratch_operands = 1 : i64, tpu.core_type = #tpu.core_type<tc>, window_params = [{transform_indices = @transform_0, window_bounds = array<i64: 1, 4, 16>}, {pipeline_mode = #tpu.pipeline_mode<synchronous>, transform_indices = @transform_1, window_bounds = array<i64: 2, 32>}, {pipeline_mode = #tpu.pipeline_mode<synchronous>, transform_indices = @transform_2, window_bounds = array<i64: 5, 8, 4>}, {pipeline_mode = #tpu.pipeline_mode<synchronous>, transform_indices = @transform_3, window_bounds = array<i64: 8, 1>}, {pipeline_mode = #tpu.pipeline_mode<synchronous>, transform_indices = @transform_4, window_bounds = array<i64: 8, 1>}, {pipeline_mode = #tpu.pipeline_mode<synchronous>, transform_indices = @transform_5, window_bounds = array<i64: 8, 1>}, {pipeline_mode = #tpu.pipeline_mode<synchronous>, transform_indices = @transform_6, window_bounds = array<i64: 5, 8, 8>}, {pipeline_mode = #tpu.pipeline_mode<synchronous>, transform_indices = @transform_7, window_bounds = array<i64: 8, 1>}, {pipeline_mode = #tpu.pipeline_mode<synchronous>, transform_indices = @transform_8, window_bounds = array<i64: 8, 1>}, {pipeline_mode = #tpu.pipeline_mode<synchronous>, transform_indices = @transform_9, window_bounds = array<i64: 8, 1>}, {pipeline_mode = #tpu.pipeline_mode<synchronous>, transform_indices = @transform_10, window_bounds = array<i64: 8, 32>}, {pipeline_mode = #tpu.pipeline_mode<synchronous>, transform_indices = @transform_11, window_bounds = array<i64: 8, 1>}, {pipeline_mode = #tpu.pipeline_mode<synchronous>, transform_indices = @transform_12, window_bounds = array<i64: 8, 4>}, {pipeline_mode = #tpu.pipeline_mode<synchronous>, transform_indices = @transform_13, window_bounds = array<i64: 8, 1>}, {transform_indices = @transform_14, window_bounds = array<i64: 1, 8, 16>}]} {
    %cst = arith.constant 0.000000e+00 : f32
    %0 = vector.broadcast %cst : f32 to vector<8x20xf32>
    %c0 = arith.constant 0 : index
    %c0_0 = arith.constant 0 : index
    %1 = vector.load %arg16[%c0, %c0_0] : memref<8x20xf32, #tpu.memory_space<vmem>>, vector<8x20xf32>
    tpu.vector_store %arg16[%c0, %c0_0], %0 {strides = array<i32>} : memref<8x20xf32, #tpu.memory_space<vmem>>, vector<8x20xf32>,
    %c0_1 = arith.constant 0 : index
    %c0_2 = arith.constant 0 : index
    %c0_3 = arith.constant 0 : index
    %2 = vector.load %arg1[%c0_1, %c0_2, %c0_3] : memref<1x4x16xf32, #tpu.memory_space<vmem>>, vector<1x4x16xf32>
    %3 = vector.shape_cast %2 : vector<1x4x16xf32> to vector<4x16xf32>
    %4 = arith.index_cast %arg0 : i32 to index
    %c0_4 = arith.constant 0 : index
    %5 = vector.load %arg2[%4, %c0_4] : memref<2x32xf32, #tpu.memory_space<vmem>>, vector<1x32xf32>
    %c0_5 = arith.constant 0 : index
    %c0_6 = arith.constant 0 : index
    %6 = vector.load %arg11[%c0_5, %c0_6] : memref<8x32xf32, #tpu.memory_space<vmem>>, vector<8x32xf32>
    %cst_7 = arith.constant 0.000000e+00 : f32
    %7 = vector.broadcast %cst_7 : f32 to vector<1x32xf32>
    %8 = arith.maximumf %5, %7 : vector<1x32xf32>
    %9 = math.absf %5 : vector<1x32xf32>
    %cst_8 = arith.constant 0.000000e+00 : f32
    %10 = vector.broadcast %cst_8 : f32 to vector<1x32xf32>
    %11 = arith.subf %10, %9 : vector<1x32xf32>
    %12 = math.exp %11 : vector<1x32xf32>
    %cst_9 = arith.constant 1.000000e+00 : f32
    %13 = vector.broadcast %cst_9 : f32 to vector<1x32xf32>
    %14 = arith.addf %13, %12 : vector<1x32xf32>
    %15 = math.log %14 : vector<1x32xf32>
    %16 = arith.addf %8, %15 : vector<1x32xf32>
    %17 = math.tanh %16 : vector<1x32xf32>
    %18 = arith.mulf %5, %17 : vector<1x32xf32>
    %19 = vector.broadcast %18 : vector<1x32xf32> to vector<8x32xf32>
    %20 = arith.mulf %6, %19 : vector<8x32xf32>
    %cst_10 = arith.constant dense<0.000000e+00> : vector<8xf32>
    %21 = vector.multi_reduction <add>, %20, %cst_10 [1] : vector<8x32xf32> to vector<8xf32>
    %22 = vector.shape_cast %21 : vector<8xf32> to vector<8x1xf32>
    %c0_11 = arith.constant 0 : index
    %c0_12 = arith.constant 0 : index
    %23 = vector.load %arg12[%c0_11, %c0_12] : memref<8x1xf32, #tpu.memory_space<vmem>>, vector<8x1xf32>
    %24 = arith.addf %22, %23 : vector<8x1xf32>
    %c0_13 = arith.constant 0 : index
    %c0_14 = arith.constant 0 : index
    %25 = vector.load %arg4[%c0_13, %c0_14] : memref<8x1xf32, #tpu.memory_space<vmem>>, vector<8x1xf32>
    %c0_15 = arith.constant 0 : index
    %c2 = arith.constant 2 : index
    %26 = vector.load %arg16[%c0_15, %c2] : memref<8x20xf32, #tpu.memory_space<vmem>>, vector<4x16xf32>
    tpu.vector_store %arg16[%c0_15, %c2], %3 {strides = array<i32>} : memref<8x20xf32, #tpu.memory_space<vmem>>, vector<4x16xf32>,
    %cst_16 = arith.constant 0.000000e+00 : f32
    %27 = vector.broadcast %cst_16 : f32 to vector<8x16xf32>
    %c0_17 = arith.constant 0 : index
    %c0_18 = arith.constant 0 : index
    %28 = vector.load %arg16[%c0_17, %c0_18] : memref<8x20xf32, #tpu.memory_space<vmem>>, vector<4x16xf32>
    %c0_19 = arith.constant 0 : index
    %c0_20 = arith.constant 0 : index
    %c0_21 = arith.constant 0 : index
    %29 = vector.load %arg3[%c0_19, %c0_20, %c0_21] : memref<5x8x4xf32, #tpu.memory_space<vmem>>, vector<1x8x4xf32>
    %30 = vector.shape_cast %29 : vector<1x8x4xf32> to vector<8x4xf32>
    %cst_22 = arith.constant dense<0.000000e+00> : vector<8x16xf32>
    %31 = tpu.matmul %30, %28, %cst_22 {dimension_numbers = #tpu.dot_dimension_numbers<[1], [0], [0], [1], [0, 0, 1, 1], [], []>, precision = #tpu.contract_precision<fp32>} : vector<8x4xf32>, vector<4x16xf32>, vector<8x16xf32> -> vector<8x16xf32>
    %32 = arith.addf %27, %31 : vector<8x16xf32>
    %c0_23 = arith.constant 0 : index
    %c1 = arith.constant 1 : index
    %33 = vector.load %arg16[%c0_23, %c1] : memref<8x20xf32, #tpu.memory_space<vmem>>, vector<4x16xf32>
    %c1_24 = arith.constant 1 : index
    %c0_25 = arith.constant 0 : index
    %c0_26 = arith.constant 0 : index
    %34 = vector.load %arg3[%c1_24, %c0_25, %c0_26] : memref<5x8x4xf32, #tpu.memory_space<vmem>>, vector<1x8x4xf32>
    %35 = vector.shape_cast %34 : vector<1x8x4xf32> to vector<8x4xf32>
    %cst_27 = arith.constant dense<0.000000e+00> : vector<8x16xf32>
    %36 = tpu.matmul %35, %33, %cst_27 {dimension_numbers = #tpu.dot_dimension_numbers<[1], [0], [0], [1], [0, 0, 1, 1], [], []>, precision = #tpu.contract_precision<fp32>} : vector<8x4xf32>, vector<4x16xf32>, vector<8x16xf32> -> vector<8x16xf32>
    %37 = arith.addf %32, %36 : vector<8x16xf32>
    %c0_28 = arith.constant 0 : index
    %c2_29 = arith.constant 2 : index
    %38 = vector.load %arg16[%c0_28, %c2_29] : memref<8x20xf32, #tpu.memory_space<vmem>>, vector<4x16xf32>
    %c2_30 = arith.constant 2 : index
    %c0_31 = arith.constant 0 : index
    %c0_32 = arith.constant 0 : index
    %39 = vector.load %arg3[%c2_30, %c0_31, %c0_32] : memref<5x8x4xf32, #tpu.memory_space<vmem>>, vector<1x8x4xf32>
    %40 = vector.shape_cast %39 : vector<1x8x4xf32> to vector<8x4xf32>
    %cst_33 = arith.constant dense<0.000000e+00> : vector<8x16xf32>
    %41 = tpu.matmul %40, %38, %cst_33 {dimension_numbers = #tpu.dot_dimension_numbers<[1], [0], [0], [1], [0, 0, 1, 1], [], []>, precision = #tpu.contract_precision<fp32>} : vector<8x4xf32>, vector<4x16xf32>, vector<8x16xf32> -> vector<8x16xf32>
    %42 = arith.addf %37, %41 : vector<8x16xf32>
    %c0_34 = arith.constant 0 : index
    %c3 = arith.constant 3 : index
    %43 = vector.load %arg16[%c0_34, %c3] : memref<8x20xf32, #tpu.memory_space<vmem>>, vector<4x16xf32>
    %c3_35 = arith.constant 3 : index
    %c0_36 = arith.constant 0 : index
    %c0_37 = arith.constant 0 : index
    %44 = vector.load %arg3[%c3_35, %c0_36, %c0_37] : memref<5x8x4xf32, #tpu.memory_space<vmem>>, vector<1x8x4xf32>
    %45 = vector.shape_cast %44 : vector<1x8x4xf32> to vector<8x4xf32>
    %cst_38 = arith.constant dense<0.000000e+00> : vector<8x16xf32>
    %46 = tpu.matmul %45, %43, %cst_38 {dimension_numbers = #tpu.dot_dimension_numbers<[1], [0], [0], [1], [0, 0, 1, 1], [], []>, precision = #tpu.contract_precision<fp32>} : vector<8x4xf32>, vector<4x16xf32>, vector<8x16xf32> -> vector<8x16xf32>
    %47 = arith.addf %42, %46 : vector<8x16xf32>
    %c0_39 = arith.constant 0 : index
    %c4 = arith.constant 4 : index
    %48 = vector.load %arg16[%c0_39, %c4] : memref<8x20xf32, #tpu.memory_space<vmem>>, vector<4x16xf32>
    %c4_40 = arith.constant 4 : index
    %c0_41 = arith.constant 0 : index
    %c0_42 = arith.constant 0 : index
    %49 = vector.load %arg3[%c4_40, %c0_41, %c0_42] : memref<5x8x4xf32, #tpu.memory_space<vmem>>, vector<1x8x4xf32>
    %50 = vector.shape_cast %49 : vector<1x8x4xf32> to vector<8x4xf32>
    %cst_43 = arith.constant dense<0.000000e+00> : vector<8x16xf32>
    %51 = tpu.matmul %50, %48, %cst_43 {dimension_numbers = #tpu.dot_dimension_numbers<[1], [0], [0], [1], [0, 0, 1, 1], [], []>, precision = #tpu.contract_precision<fp32>} : vector<8x4xf32>, vector<4x16xf32>, vector<8x16xf32> -> vector<8x16xf32>
    %52 = arith.addf %47, %51 : vector<8x16xf32>
    %53 = vector.broadcast %25 : vector<8x1xf32> to vector<8x16xf32>
    %54 = arith.addf %52, %53 : vector<8x16xf32>
    %c0_44 = arith.constant 0 : index
    %c0_45 = arith.constant 0 : index
    %55 = vector.load %arg5[%c0_44, %c0_45] : memref<8x1xf32, #tpu.memory_space<vmem>>, vector<8x1xf32>
    %c0_46 = arith.constant 0 : index
    %c0_47 = arith.constant 0 : index
    %56 = vector.load %arg6[%c0_46, %c0_47] : memref<8x1xf32, #tpu.memory_space<vmem>>, vector<8x1xf32>
    %cst_48 = arith.constant dense<0.000000e+00> : vector<8xf32>
    %57 = vector.multi_reduction <add>, %54, %cst_48 [1] : vector<8x16xf32> to vector<8xf32>
    %58 = vector.shape_cast %57 : vector<8xf32> to vector<8x1xf32>
    %cst_49 = arith.constant 1.600000e+01 : f32
    %59 = vector.broadcast %cst_49 : f32 to vector<8x1xf32>
    %60 = arith.divf %58, %59 : vector<8x1xf32>
    %61 = vector.broadcast %60 : vector<8x1xf32> to vector<8x16xf32>
    %62 = arith.subf %54, %61 : vector<8x16xf32>
    %63 = arith.mulf %62, %62 : vector<8x16xf32>
    %cst_50 = arith.constant dense<0.000000e+00> : vector<8xf32>
    %64 = vector.multi_reduction <add>, %63, %cst_50 [1] : vector<8x16xf32> to vector<8xf32>
    %65 = vector.shape_cast %64 : vector<8xf32> to vector<8x1xf32>
    %cst_51 = arith.constant 1.600000e+01 : f32
    %66 = vector.broadcast %cst_51 : f32 to vector<8x1xf32>
    %67 = arith.divf %65, %66 : vector<8x1xf32>
    %cst_52 = arith.constant 9.99999974E-6 : f32
    %68 = vector.broadcast %cst_52 : f32 to vector<8x1xf32>
    %69 = arith.addf %67, %68 : vector<8x1xf32>
    %70 = math.sqrt %69 : vector<8x1xf32>
    %71 = vector.broadcast %70 : vector<8x1xf32> to vector<8x16xf32>
    %72 = arith.divf %62, %71 : vector<8x16xf32>
    %73 = vector.broadcast %55 : vector<8x1xf32> to vector<8x16xf32>
    %74 = arith.mulf %72, %73 : vector<8x16xf32>
    %75 = vector.broadcast %56 : vector<8x1xf32> to vector<8x16xf32>
    %76 = arith.addf %74, %75 : vector<8x16xf32>
    %cst_53 = arith.constant 0.000000e+00 : f32
    %77 = vector.broadcast %cst_53 : f32 to vector<8x16xf32>
    %78 = arith.maximumf %76, %77 : vector<8x16xf32>
    %79 = math.absf %76 : vector<8x16xf32>
    %cst_54 = arith.constant 0.000000e+00 : f32
    %80 = vector.broadcast %cst_54 : f32 to vector<8x16xf32>
    %81 = arith.subf %80, %79 : vector<8x16xf32>
    %82 = math.exp %81 : vector<8x16xf32>
    %cst_55 = arith.constant 1.000000e+00 : f32
    %83 = vector.broadcast %cst_55 : f32 to vector<8x16xf32>
    %84 = arith.addf %83, %82 : vector<8x16xf32>
    %85 = math.log %84 : vector<8x16xf32>
    %86 = arith.addf %78, %85 : vector<8x16xf32>
    %87 = math.tanh %86 : vector<8x16xf32>
    %88 = arith.mulf %76, %87 : vector<8x16xf32>
    %89 = vector.broadcast %24 : vector<8x1xf32> to vector<8x16xf32>
    %90 = arith.addf %88, %89 : vector<8x16xf32>
    %c0_56 = arith.constant 0 : index
    %c0_57 = arith.constant 0 : index
    %91 = vector.load %arg8[%c0_56, %c0_57] : memref<8x1xf32, #tpu.memory_space<vmem>>, vector<8x1xf32>
    %c0_58 = arith.constant 0 : index
    %c2_59 = arith.constant 2 : index
    %92 = vector.load %arg16[%c0_58, %c2_59] : memref<8x20xf32, #tpu.memory_space<vmem>>, vector<8x16xf32>
    tpu.vector_store %arg16[%c0_58, %c2_59], %90 {strides = array<i32>} : memref<8x20xf32, #tpu.memory_space<vmem>>, vector<8x16xf32>,
    %cst_60 = arith.constant 0.000000e+00 : f32
    %93 = vector.broadcast %cst_60 : f32 to vector<8x16xf32>
    %c0_61 = arith.constant 0 : index
    %c0_62 = arith.constant 0 : index
    %94 = vector.load %arg16[%c0_61, %c0_62] : memref<8x20xf32, #tpu.memory_space<vmem>>, vector<8x16xf32>
    %c0_63 = arith.constant 0 : index
    %c0_64 = arith.constant 0 : index
    %c0_65 = arith.constant 0 : index
    %95 = vector.load %arg7[%c0_63, %c0_64, %c0_65] : memref<5x8x8xf32, #tpu.memory_space<vmem>>, vector<1x8x8xf32>
    %96 = vector.shape_cast %95 : vector<1x8x8xf32> to vector<8x8xf32>
    %cst_66 = arith.constant dense<0.000000e+00> : vector<8x16xf32>
    %97 = tpu.matmul %96, %94, %cst_66 {dimension_numbers = #tpu.dot_dimension_numbers<[1], [0], [0], [1], [0, 0, 1, 1], [], []>, precision = #tpu.contract_precision<fp32>} : vector<8x8xf32>, vector<8x16xf32>, vector<8x16xf32> -> vector<8x16xf32>
    %98 = arith.addf %93, %97 : vector<8x16xf32>
    %c0_67 = arith.constant 0 : index
    %c1_68 = arith.constant 1 : index
    %99 = vector.load %arg16[%c0_67, %c1_68] : memref<8x20xf32, #tpu.memory_space<vmem>>, vector<8x16xf32>
    %c1_69 = arith.constant 1 : index
    %c0_70 = arith.constant 0 : index
    %c0_71 = arith.constant 0 : index
    %100 = vector.load %arg7[%c1_69, %c0_70, %c0_71] : memref<5x8x8xf32, #tpu.memory_space<vmem>>, vector<1x8x8xf32>
    %101 = vector.shape_cast %100 : vector<1x8x8xf32> to vector<8x8xf32>
    %cst_72 = arith.constant dense<0.000000e+00> : vector<8x16xf32>
    %102 = tpu.matmul %101, %99, %cst_72 {dimension_numbers = #tpu.dot_dimension_numbers<[1], [0], [0], [1], [0, 0, 1, 1], [], []>, precision = #tpu.contract_precision<fp32>} : vector<8x8xf32>, vector<8x16xf32>, vector<8x16xf32> -> vector<8x16xf32>
    %103 = arith.addf %98, %102 : vector<8x16xf32>
    %c0_73 = arith.constant 0 : index
    %c2_74 = arith.constant 2 : index
    %104 = vector.load %arg16[%c0_73, %c2_74] : memref<8x20xf32, #tpu.memory_space<vmem>>, vector<8x16xf32>
    %c2_75 = arith.constant 2 : index
    %c0_76 = arith.constant 0 : index
    %c0_77 = arith.constant 0 : index
    %105 = vector.load %arg7[%c2_75, %c0_76, %c0_77] : memref<5x8x8xf32, #tpu.memory_space<vmem>>, vector<1x8x8xf32>
    %106 = vector.shape_cast %105 : vector<1x8x8xf32> to vector<8x8xf32>
    %cst_78 = arith.constant dense<0.000000e+00> : vector<8x16xf32>
    %107 = tpu.matmul %106, %104, %cst_78 {dimension_numbers = #tpu.dot_dimension_numbers<[1], [0], [0], [1], [0, 0, 1, 1], [], []>, precision = #tpu.contract_precision<fp32>} : vector<8x8xf32>, vector<8x16xf32>, vector<8x16xf32> -> vector<8x16xf32>
    %108 = arith.addf %103, %107 : vector<8x16xf32>
    %c0_79 = arith.constant 0 : index
    %c3_80 = arith.constant 3 : index
    %109 = vector.load %arg16[%c0_79, %c3_80] : memref<8x20xf32, #tpu.memory_space<vmem>>, vector<8x16xf32>
    %c3_81 = arith.constant 3 : index
    %c0_82 = arith.constant 0 : index
    %c0_83 = arith.constant 0 : index
    %110 = vector.load %arg7[%c3_81, %c0_82, %c0_83] : memref<5x8x8xf32, #tpu.memory_space<vmem>>, vector<1x8x8xf32>
    %111 = vector.shape_cast %110 : vector<1x8x8xf32> to vector<8x8xf32>
    %cst_84 = arith.constant dense<0.000000e+00> : vector<8x16xf32>
    %112 = tpu.matmul %111, %109, %cst_84 {dimension_numbers = #tpu.dot_dimension_numbers<[1], [0], [0], [1], [0, 0, 1, 1], [], []>, precision = #tpu.contract_precision<fp32>} : vector<8x8xf32>, vector<8x16xf32>, vector<8x16xf32> -> vector<8x16xf32>
    %113 = arith.addf %108, %112 : vector<8x16xf32>
    %c0_85 = arith.constant 0 : index
    %c4_86 = arith.constant 4 : index
    %114 = vector.load %arg16[%c0_85, %c4_86] : memref<8x20xf32, #tpu.memory_space<vmem>>, vector<8x16xf32>
    %c4_87 = arith.constant 4 : index
    %c0_88 = arith.constant 0 : index
    %c0_89 = arith.constant 0 : index
    %115 = vector.load %arg7[%c4_87, %c0_88, %c0_89] : memref<5x8x8xf32, #tpu.memory_space<vmem>>, vector<1x8x8xf32>
    %116 = vector.shape_cast %115 : vector<1x8x8xf32> to vector<8x8xf32>
    %cst_90 = arith.constant dense<0.000000e+00> : vector<8x16xf32>
    %117 = tpu.matmul %116, %114, %cst_90 {dimension_numbers = #tpu.dot_dimension_numbers<[1], [0], [0], [1], [0, 0, 1, 1], [], []>, precision = #tpu.contract_precision<fp32>} : vector<8x8xf32>, vector<8x16xf32>, vector<8x16xf32> -> vector<8x16xf32>
    %118 = arith.addf %113, %117 : vector<8x16xf32>
    %119 = vector.broadcast %91 : vector<8x1xf32> to vector<8x16xf32>
    %120 = arith.addf %118, %119 : vector<8x16xf32>
    %c0_91 = arith.constant 0 : index
    %c0_92 = arith.constant 0 : index
    %121 = vector.load %arg9[%c0_91, %c0_92] : memref<8x1xf32, #tpu.memory_space<vmem>>, vector<8x1xf32>
    %c0_93 = arith.constant 0 : index
    %c0_94 = arith.constant 0 : index
    %122 = vector.load %arg10[%c0_93, %c0_94] : memref<8x1xf32, #tpu.memory_space<vmem>>, vector<8x1xf32>
    %cst_95 = arith.constant dense<0.000000e+00> : vector<8xf32>
    %123 = vector.multi_reduction <add>, %120, %cst_95 [1] : vector<8x16xf32> to vector<8xf32>
    %124 = vector.shape_cast %123 : vector<8xf32> to vector<8x1xf32>
    %cst_96 = arith.constant 1.600000e+01 : f32
    %125 = vector.broadcast %cst_96 : f32 to vector<8x1xf32>
    %126 = arith.divf %124, %125 : vector<8x1xf32>
    %127 = vector.broadcast %126 : vector<8x1xf32> to vector<8x16xf32>
    %128 = arith.subf %120, %127 : vector<8x16xf32>
    %129 = arith.mulf %128, %128 : vector<8x16xf32>
    %cst_97 = arith.constant dense<0.000000e+00> : vector<8xf32>
    %130 = vector.multi_reduction <add>, %129, %cst_97 [1] : vector<8x16xf32> to vector<8xf32>
    %131 = vector.shape_cast %130 : vector<8xf32> to vector<8x1xf32>
    %cst_98 = arith.constant 1.600000e+01 : f32
    %132 = vector.broadcast %cst_98 : f32 to vector<8x1xf32>
    %133 = arith.divf %131, %132 : vector<8x1xf32>
    %cst_99 = arith.constant 9.99999974E-6 : f32
    %134 = vector.broadcast %cst_99 : f32 to vector<8x1xf32>
    %135 = arith.addf %133, %134 : vector<8x1xf32>
    %136 = math.sqrt %135 : vector<8x1xf32>
    %137 = vector.broadcast %136 : vector<8x1xf32> to vector<8x16xf32>
    %138 = arith.divf %128, %137 : vector<8x16xf32>
    %139 = vector.broadcast %121 : vector<8x1xf32> to vector<8x16xf32>
    %140 = arith.mulf %138, %139 : vector<8x16xf32>
    %141 = vector.broadcast %122 : vector<8x1xf32> to vector<8x16xf32>
    %142 = arith.addf %140, %141 : vector<8x16xf32>
    %cst_100 = arith.constant 0.000000e+00 : f32
    %143 = vector.broadcast %cst_100 : f32 to vector<8x16xf32>
    %144 = arith.maximumf %142, %143 : vector<8x16xf32>
    %145 = math.absf %142 : vector<8x16xf32>
    %cst_101 = arith.constant 0.000000e+00 : f32
    %146 = vector.broadcast %cst_101 : f32 to vector<8x16xf32>
    %147 = arith.subf %146, %145 : vector<8x16xf32>
    %148 = math.exp %147 : vector<8x16xf32>
    %cst_102 = arith.constant 1.000000e+00 : f32
    %149 = vector.broadcast %cst_102 : f32 to vector<8x16xf32>
    %150 = arith.addf %149, %148 : vector<8x16xf32>
    %151 = math.log %150 : vector<8x16xf32>
    %152 = arith.addf %144, %151 : vector<8x16xf32>
    %153 = math.tanh %152 : vector<8x16xf32>
    %154 = arith.mulf %142, %153 : vector<8x16xf32>
    %c0_103 = arith.constant 0 : index
    %c0_104 = arith.constant 0 : index
    %155 = vector.load %arg13[%c0_103, %c0_104] : memref<8x4xf32, #tpu.memory_space<vmem>>, vector<8x4xf32>
    %cst_105 = arith.constant dense<0.000000e+00> : vector<8x16xf32>
    %156 = tpu.matmul %155, %3, %cst_105 {dimension_numbers = #tpu.dot_dimension_numbers<[1], [0], [0], [1], [0, 0, 1, 1], [], []>, precision = #tpu.contract_precision<fp32>} : vector<8x4xf32>, vector<4x16xf32>, vector<8x16xf32> -> vector<8x16xf32>
    %c0_106 = arith.constant 0 : index
    %c0_107 = arith.constant 0 : index
    %157 = vector.load %arg14[%c0_106, %c0_107] : memref<8x1xf32, #tpu.memory_space<vmem>>, vector<8x1xf32>
    %158 = vector.broadcast %157 : vector<8x1xf32> to vector<8x16xf32>
    %159 = arith.addf %156, %158 : vector<8x16xf32>
    %160 = arith.addf %154, %159 : vector<8x16xf32>
    %c0_108 = arith.constant 0 : index
    %c0_109 = arith.constant 0 : index
    %c0_110 = arith.constant 0 : index
    %161 = vector.load %arg15[%c0_108, %c0_109, %c0_110] : memref<1x8x16xf32, #tpu.memory_space<vmem>>, vector<1x8x16xf32>
    %162 = vector.shape_cast %161 : vector<1x8x16xf32> to vector<8x16xf32>
    %163 = vector.shape_cast %160 : vector<8x16xf32> to vector<1x8x16xf32>
    tpu.vector_store %arg15[%c0_108, %c0_109, %c0_110], %163 {strides = array<i32>} : memref<1x8x16xf32, #tpu.memory_space<vmem>>, vector<1x8x16xf32>,
    return
  }
  func.func @transform_0(%arg0: i32) -> (i32, i32, i32) {
    %c0_i32 = arith.constant 0 : i32
    %c0_i32_0 = arith.constant 0 : i32
    %c0_i32_1 = arith.constant 0 : i32
    return %arg0, %c0_i32, %c0_i32_0 : i32, i32, i32
  }
  func.func @transform_1(%arg0: i32) -> (i32, i32) {
    %c0_i32 = arith.constant 0 : i32
    %c0_i32_0 = arith.constant 0 : i32
    %c0_i32_1 = arith.constant 0 : i32
    return %c0_i32, %c0_i32_0 : i32, i32
  }
  func.func @transform_2(%arg0: i32) -> (i32, i32, i32) {
    %c0_i32 = arith.constant 0 : i32
    %c0_i32_0 = arith.constant 0 : i32
    %c0_i32_1 = arith.constant 0 : i32
    %c0_i32_2 = arith.constant 0 : i32
    return %c0_i32, %c0_i32_0, %c0_i32_1 : i32, i32, i32
  }
  func.func @transform_3(%arg0: i32) -> (i32, i32) {
    %c0_i32 = arith.constant 0 : i32
    %c0_i32_0 = arith.constant 0 : i32
    %c0_i32_1 = arith.constant 0 : i32
    return %c0_i32, %c0_i32_0 : i32, i32
  }
  func.func @transform_4(%arg0: i32) -> (i32, i32) {
    %c0_i32 = arith.constant 0 : i32
    %c0_i32_0 = arith.constant 0 : i32
    %c0_i32_1 = arith.constant 0 : i32
    return %c0_i32, %c0_i32_0 : i32, i32
  }
  func.func @transform_5(%arg0: i32) -> (i32, i32) {
    %c0_i32 = arith.constant 0 : i32
    %c0_i32_0 = arith.constant 0 : i32
    %c0_i32_1 = arith.constant 0 : i32
    return %c0_i32, %c0_i32_0 : i32, i32
  }
  func.func @transform_6(%arg0: i32) -> (i32, i32, i32) {
    %c0_i32 = arith.constant 0 : i32
    %c0_i32_0 = arith.constant 0 : i32
    %c0_i32_1 = arith.constant 0 : i32
    %c0_i32_2 = arith.constant 0 : i32
    return %c0_i32, %c0_i32_0, %c0_i32_1 : i32, i32, i32
  }
  func.func @transform_7(%arg0: i32) -> (i32, i32) {
    %c0_i32 = arith.constant 0 : i32
    %c0_i32_0 = arith.constant 0 : i32
    %c0_i32_1 = arith.constant 0 : i32
    return %c0_i32, %c0_i32_0 : i32, i32
  }
  func.func @transform_8(%arg0: i32) -> (i32, i32) {
    %c0_i32 = arith.constant 0 : i32
    %c0_i32_0 = arith.constant 0 : i32
    %c0_i32_1 = arith.constant 0 : i32
    return %c0_i32, %c0_i32_0 : i32, i32
  }
  func.func @transform_9(%arg0: i32) -> (i32, i32) {
    %c0_i32 = arith.constant 0 : i32
    %c0_i32_0 = arith.constant 0 : i32
    %c0_i32_1 = arith.constant 0 : i32
    return %c0_i32, %c0_i32_0 : i32, i32
  }
  func.func @transform_10(%arg0: i32) -> (i32, i32) {
    %c0_i32 = arith.constant 0 : i32
    %c0_i32_0 = arith.constant 0 : i32
    %c0_i32_1 = arith.constant 0 : i32
    return %c0_i32, %c0_i32_0 : i32, i32
  }
  func.func @transform_11(%arg0: i32) -> (i32, i32) {
    %c0_i32 = arith.constant 0 : i32
    %c0_i32_0 = arith.constant 0 : i32
    %c0_i32_1 = arith.constant 0 : i32
    return %c0_i32, %c0_i32_0 : i32, i32
  }
  func.func @transform_12(%arg0: i32) -> (i32, i32) {
    %c0_i32 = arith.constant 0 : i32
    %c0_i32_0 = arith.constant 0 : i32
    %c0_i32_1 = arith.constant 0 : i32
    return %c0_i32, %c0_i32_0 : i32, i32
  }
  func.func @transform_13(%arg0: i32) -> (i32, i32) {
    %c0_i32 = arith.constant 0 : i32
    %c0_i32_0 = arith.constant 0 : i32
    %c0_i32_1 = arith.constant 0 : i32
    return %c0_i32, %c0_i32_0 : i32, i32
  }
  func.func @transform_14(%arg0: i32) -> (i32, i32, i32) {
    %c0_i32 = arith.constant 0 : i32
    %c0_i32_0 = arith.constant 0 : i32
    %c0_i32_1 = arith.constant 0 : i32
    return %arg0, %c0_i32, %c0_i32_0 : i32, i32, i32
  }
}

</mosaic_0001>

<llo_original>
// kernel: tpu_custom_call.1
$region0: #{tpu_custom_call.1}
  #allocation0 [shape = 'u32[]', space=smem, size = 0x4, offset = 0x4, fixed_abs, tag = 'smem constant byte address 0x4 - core index']
  #allocation1 [shape = 'u32[72,128]{1,0:T(1,128)}', space=vmem, size = 0x9000, scoped, tag = 'internal scratch']
  #allocation2 [shape = 'f32[8,20]{1,0:T(8,128)}', space=vmem, size = 0x1000, scoped, tag = 'scratch operand']
  %s0 = inlined_call_operand.vmem [shape: f32[2,4,16], index: 0, kind: input, shape index: {}]
  %s1 = inlined_call_operand.vmem [shape: f32[2,32], index: 1, kind: input, shape index: {}]
  %s2 = inlined_call_operand.vmem [shape: f32[5,8,4], index: 2, kind: input, shape index: {}]
  %s3 = inlined_call_operand.vmem [shape: f32[8,1], index: 3, kind: input, shape index: {}]
  %s4 = inlined_call_operand.vmem [shape: f32[8,1], index: 4, kind: input, shape index: {}]
  %s5 = inlined_call_operand.vmem [shape: f32[8,1], index: 5, kind: input, shape index: {}]
  %s6 = inlined_call_operand.vmem [shape: f32[5,8,8], index: 6, kind: input, shape index: {}]
  %s7 = inlined_call_operand.vmem [shape: f32[8,1], index: 7, kind: input, shape index: {}]
  %s8 = inlined_call_operand.vmem [shape: f32[8,1], index: 8, kind: input, shape index: {}]
  %s9 = inlined_call_operand.vmem [shape: f32[8,1], index: 9, kind: input, shape index: {}]
  %s10 = inlined_call_operand.vmem [shape: f32[8,32], index: 10, kind: input, shape index: {}]
  %s11 = inlined_call_operand.vmem [shape: f32[8,1], index: 11, kind: input, shape index: {}]
  %s12 = inlined_call_operand.vmem [shape: f32[8,4], index: 12, kind: input, shape index: {}]
  %s13 = inlined_call_operand.vmem [shape: f32[8,1], index: 13, kind: input, shape index: {}]
  %s14 = inlined_call_operand.hbm [shape: f32[2,8,16], index: 14, kind: output, shape index: {}]
  %s15 = sld [smem:[#allocation0]]
  $region89: #{tpu_custom_call.1} parent=0
    _
  %s17 = ssub.s32 1, %s15
  %s18 = scalar_select 0, %s17, %s15
  $region1: #{tpu_custom_call.1} parent=0
    #allocation3 [shape = 'u8[8192]{0}', space=vmem, size = 0x2000, scoped, tag = 'output window, operand 0']
    #allocation4 [shape = 's32[2]{0}', space=sflag, size = 0x8, scoped, tag = 'scoped memory for tpu_custom_call.1']
    %19 = vsyncpa [#allocation4], 0
    %s20 = scalar_lea.sflag [#allocation4], 1
    %21 = vsyncpa %s20, 0
    loop: start=0, step=1, limit=4
    $region2: #{tpu_custom_call.1} parent=1 // loop_pre_header
      _
    $region3: #{tpu_custom_call.1} parent=1 // loop_header
      %s23 = sphi 0, %s27
      %p24 = scmp.ge.s32.totalorder %s23, 4
      %s33 = sphi 0, %s35
      %s36 = sphi 0, %s33
      %s37 = sphi 0, %s36
      %s53 = sphi 0, %s37
      %s57 = sphi 0, %s57
      %s59 = sphi 0, %s57
      %s60 = sphi 0, %s59
      %s74 = sphi 0, %s60
      %s78 = sphi 0, %s78
      %s80 = sphi 0, %s78
      %s81 = sphi 0, %s80
      %s95 = sphi 0, %s81
      %s99 = sphi 0, %s99
      %s101 = sphi 0, %s99
      %s102 = sphi 0, %s101
      %s116 = sphi 0, %s102
      %s120 = sphi 0, %s120
      %s122 = sphi 0, %s120
      %s123 = sphi 0, %s122
      %s137 = sphi 0, %s123
      %s141 = sphi 0, %s141
      %s143 = sphi 0, %s141
      %s144 = sphi 0, %s143
      %s158 = sphi 0, %s144
      %s162 = sphi 0, %s162
      %s164 = sphi 0, %s162
      %s165 = sphi 0, %s164
      %s179 = sphi 0, %s165
      %s183 = sphi 0, %s183
      %s185 = sphi 0, %s183
      %s186 = sphi 0, %s185
      %s200 = sphi 0, %s186
      %s204 = sphi 0, %s204
      %s206 = sphi 0, %s204
      %s207 = sphi 0, %s206
      %s221 = sphi 0, %s207
      %s225 = sphi 0, %s225
      %s227 = sphi 0, %s225
      %s228 = sphi 0, %s227
      %s242 = sphi 0, %s228
      %s246 = sphi 0, %s246
      %s248 = sphi 0, %s246
      %s249 = sphi 0, %s248
      %s263 = sphi 0, %s249
      %s267 = sphi 0, %s267
      %s269 = sphi 0, %s267
      %s270 = sphi 0, %s269
      %s284 = sphi 0, %s270
      %s288 = sphi 0, %s288
      %s290 = sphi 0, %s288
      %s291 = sphi 0, %s290
      %s305 = sphi 0, %s291
      %s309 = sphi 0, %s309
      %s311 = sphi 0, %s309
      %s312 = sphi 0, %s311
      %s326 = sphi 0, %s312
      %s332 = sphi 0, %s334
      %s335 = sphi 0, %s332
      %s336 = sphi 0, %s335
      %s352 = sphi 0, %s336
    $region4: #{tpu_custom_call.1} parent=1 // loop_header_branch
      %26 = sbr.rel (%p24) target = $region8
    $region5: #{tpu_custom_call.1} parent=1 // loop_body
      %s28 = ssub.s32 %s23, 1
      %s29 = ssub.s32 %s23, 2
      %s30 = sadd.s32 %s23, 1
      %s31 = ssub.s32 %s23, %s30
      %p32 = scmp.eq.s32.totalorder %s31, 0
      %s34 = sadd.s32 %s33, 1
      %s35 = scalar_select %p32, %s33, %s34
      %p38 = pneg %p32
      %p39 = scmp.eq.s32.totalorder %s23, 1
      %p40 = por %p38, %p39
      %p41 = scmp.ne.s32.totalorder %s33, %s36
      %p42 = scmp.eq.s32.totalorder %s23, 0
      %p43 = por %p41, %p42
      %p44 = scmp.ne.s32.totalorder %s33, %s36
      %p45 = scmp.eq.s32.totalorder %s28, 1
      %p46 = por %p44, %p45
      %p47 = scmp.ne.s32.totalorder %s36, %s37
      %p48 = scmp.eq.s32.totalorder %s28, 0
      %p49 = por %p47, %p48
      %p50 = scmp.ne.s32.totalorder %s36, %s37
      %p51 = scmp.eq.s32.totalorder %s29, 1
      %p52 = por %p50, %p51
      %p54 = scmp.ne.s32.totalorder %s37, %s53
      %p55 = scmp.eq.s32.totalorder %s29, 0
      %p56 = por %p54, %p55
      %s58 = sadd.s32 %s57, 1
      %p61 = scmp.eq.s32.totalorder %s23, 1
      %p62 = scmp.ne.s32.totalorder %s57, %s59
      %p63 = scmp.eq.s32.totalorder %s23, 0
      %p64 = por %p62, %p63
      %p65 = scmp.ne.s32.totalorder %s57, %s59
      %p66 = scmp.eq.s32.totalorder %s28, 1
      %p67 = por %p65, %p66
      %p68 = scmp.ne.s32.totalorder %s59, %s60
      %p69 = scmp.eq.s32.totalorder %s28, 0
      %p70 = por %p68, %p69
      %p71 = scmp.ne.s32.totalorder %s59, %s60
      %p72 = scmp.eq.s32.totalorder %s29, 1
      %p73 = por %p71, %p72
      %p75 = scmp.ne.s32.totalorder %s60, %s74
      %p76 = scmp.eq.s32.totalorder %s29, 0
      %p77 = por %p75, %p76
      %s79 = sadd.s32 %s78, 1
      %p82 = scmp.eq.s32.totalorder %s23, 1
      %p83 = scmp.ne.s32.totalorder %s78, %s80
      %p84 = scmp.eq.s32.totalorder %s23, 0
      %p85 = por %p83, %p84
      %p86 = scmp.ne.s32.totalorder %s78, %s80
      %p87 = scmp.eq.s32.totalorder %s28, 1
      %p88 = por %p86, %p87
      %p89 = scmp.ne.s32.totalorder %s80, %s81
      %p90 = scmp.eq.s32.totalorder %s28, 0
      %p91 = por %p89, %p90
      %p92 = scmp.ne.s32.totalorder %s80, %s81
      %p93 = scmp.eq.s32.totalorder %s29, 1
      %p94 = por %p92, %p93
      %p96 = scmp.ne.s32.totalorder %s81, %s95
      %p97 = scmp.eq.s32.totalorder %s29, 0
      %p98 = por %p96, %p97
      %s100 = sadd.s32 %s99, 1
      %p103 = scmp.eq.s32.totalorder %s23, 1
      %p104 = scmp.ne.s32.totalorder %s99, %s101
      %p105 = scmp.eq.s32.totalorder %s23, 0
      %p106 = por %p104, %p105
      %p107 = scmp.ne.s32.totalorder %s99, %s101
      %p108 = scmp.eq.s32.totalorder %s28, 1
      %p109 = por %p107, %p108
      %p110 = scmp.ne.s32.totalorder %s101, %s102
      %p111 = scmp.eq.s32.totalorder %s28, 0
      %p112 = por %p110, %p111
      %p113 = scmp.ne.s32.totalorder %s101, %s102
      %p114 = scmp.eq.s32.totalorder %s29, 1
      %p115 = por %p113, %p114
      %p117 = scmp.ne.s32.totalorder %s102, %s116
      %p118 = scmp.eq.s32.totalorder %s29, 0
      %p119 = por %p117, %p118
      %s121 = sadd.s32 %s120, 1
      %p124 = scmp.eq.s32.totalorder %s23, 1
      %p125 = scmp.ne.s32.totalorder %s120, %s122
      %p126 = scmp.eq.s32.totalorder %s23, 0
      %p127 = por %p125, %p126
      %p128 = scmp.ne.s32.totalorder %s120, %s122
      %p129 = scmp.eq.s32.totalorder %s28, 1
      %p130 = por %p128, %p129
      %p131 = scmp.ne.s32.totalorder %s122, %s123
      %p132 = scmp.eq.s32.totalorder %s28, 0
      %p133 = por %p131, %p132
      %p134 = scmp.ne.s32.totalorder %s122, %s123
      %p135 = scmp.eq.s32.totalorder %s29, 1
      %p136 = por %p134, %p135
      %p138 = scmp.ne.s32.totalorder %s123, %s137
      %p139 = scmp.eq.s32.totalorder %s29, 0
      %p140 = por %p138, %p139
      %s142 = sadd.s32 %s141, 1
      %p145 = scmp.eq.s32.totalorder %s23, 1
      %p146 = scmp.ne.s32.totalorder %s141, %s143
      %p147 = scmp.eq.s32.totalorder %s23, 0
      %p148 = por %p146, %p147
      %p149 = scmp.ne.s32.totalorder %s141, %s143
      %p150 = scmp.eq.s32.totalorder %s28, 1
      %p151 = por %p149, %p150
      %p152 = scmp.ne.s32.totalorder %s143, %s144
      %p153 = scmp.eq.s32.totalorder %s28, 0
      %p154 = por %p152, %p153
      %p155 = scmp.ne.s32.totalorder %s143, %s144
      %p156 = scmp.eq.s32.totalorder %s29, 1
      %p157 = por %p155, %p156
      %p159 = scmp.ne.s32.totalorder %s144, %s158
      %p160 = scmp.eq.s32.totalorder %s29, 0
      %p161 = por %p159, %p160
      %s163 = sadd.s32 %s162, 1
      %p166 = scmp.eq.s32.totalorder %s23, 1
      %p167 = scmp.ne.s32.totalorder %s162, %s164
      %p168 = scmp.eq.s32.totalorder %s23, 0
      %p169 = por %p167, %p168
      %p170 = scmp.ne.s32.totalorder %s162, %s164
      %p171 = scmp.eq.s32.totalorder %s28, 1
      %p172 = por %p170, %p171
      %p173 = scmp.ne.s32.totalorder %s164, %s165
      %p174 = scmp.eq.s32.totalorder %s28, 0
      %p175 = por %p173, %p174
      %p176 = scmp.ne.s32.totalorder %s164, %s165
      %p177 = scmp.eq.s32.totalorder %s29, 1
      %p178 = por %p176, %p177
      %p180 = scmp.ne.s32.totalorder %s165, %s179
      %p181 = scmp.eq.s32.totalorder %s29, 0
      %p182 = por %p180, %p181
      %s184 = sadd.s32 %s183, 1
      %p187 = scmp.eq.s32.totalorder %s23, 1
      %p188 = scmp.ne.s32.totalorder %s183, %s185
      %p189 = scmp.eq.s32.totalorder %s23, 0
      %p190 = por %p188, %p189
      %p191 = scmp.ne.s32.totalorder %s183, %s185
      %p192 = scmp.eq.s32.totalorder %s28, 1
      %p193 = por %p191, %p192
      %p194 = scmp.ne.s32.totalorder %s185, %s186
      %p195 = scmp.eq.s32.totalorder %s28, 0
      %p196 = por %p194, %p195
      %p197 = scmp.ne.s32.totalorder %s185, %s186
      %p198 = scmp.eq.s32.totalorder %s29, 1
      %p199 = por %p197, %p198
      %p201 = scmp.ne.s32.totalorder %s186, %s200
      %p202 = scmp.eq.s32.totalorder %s29, 0
      %p203 = por %p201, %p202
      %s205 = sadd.s32 %s204, 1
      %p208 = scmp.eq.s32.totalorder %s23, 1
      %p209 = scmp.ne.s32.totalorder %s204, %s206
      %p210 = scmp.eq.s32.totalorder %s23, 0
      %p211 = por %p209, %p210
      %p212 = scmp.ne.s32.totalorder %s204, %s206
      %p213 = scmp.eq.s32.totalorder %s28, 1
      %p214 = por %p212, %p213
      %p215 = scmp.ne.s32.totalorder %s206, %s207
      %p216 = scmp.eq.s32.totalorder %s28, 0
      %p217 = por %p215, %p216
      %p218 = scmp.ne.s32.totalorder %s206, %s207
      %p219 = scmp.eq.s32.totalorder %s29, 1
      %p220 = por %p218, %p219
      %p222 = scmp.ne.s32.totalorder %s207, %s221
      %p223 = scmp.eq.s32.totalorder %s29, 0
      %p224 = por %p222, %p223
      %s226 = sadd.s32 %s225, 1
      %p229 = scmp.eq.s32.totalorder %s23, 1
      %p230 = scmp.ne.s32.totalorder %s225, %s227
      %p231 = scmp.eq.s32.totalorder %s23, 0
      %p232 = por %p230, %p231
      %p233 = scmp.ne.s32.totalorder %s225, %s227
      %p234 = scmp.eq.s32.totalorder %s28, 1
      %p235 = por %p233, %p234
      %p236 = scmp.ne.s32.totalorder %s227, %s228
      %p237 = scmp.eq.s32.totalorder %s28, 0
      %p238 = por %p236, %p237
      %p239 = scmp.ne.s32.totalorder %s227, %s228
      %p240 = scmp.eq.s32.totalorder %s29, 1
      %p241 = por %p239, %p240
      %p243 = scmp.ne.s32.totalorder %s228, %s242
      %p244 = scmp.eq.s32.totalorder %s29, 0
      %p245 = por %p243, %p244
      %s247 = sadd.s32 %s246, 1
      %p250 = scmp.eq.s32.totalorder %s23, 1
      %p251 = scmp.ne.s32.totalorder %s246, %s248
      %p252 = scmp.eq.s32.totalorder %s23, 0
      %p253 = por %p251, %p252
      %p254 = scmp.ne.s32.totalorder %s246, %s248
      %p255 = scmp.eq.s32.totalorder %s28, 1
      %p256 = por %p254, %p255
      %p257 = scmp.ne.s32.totalorder %s248, %s249
      %p258 = scmp.eq.s32.totalorder %s28, 0
      %p259 = por %p257, %p258
      %p260 = scmp.ne.s32.totalorder %s248, %s249
      %p261 = scmp.eq.s32.totalorder %s29, 1
      %p262 = por %p260, %p261
      %p264 = scmp.ne.s32.totalorder %s249, %s263
      %p265 = scmp.eq.s32.totalorder %s29, 0
      %p266 = por %p264, %p265
      %s268 = sadd.s32 %s267, 1
      %p271 = scmp.eq.s32.totalorder %s23, 1
      %p272 = scmp.ne.s32.totalorder %s267, %s269
      %p273 = scmp.eq.s32.totalorder %s23, 0
      %p274 = por %p272, %p273
      %p275 = scmp.ne.s32.totalorder %s267, %s269
      %p276 = scmp.eq.s32.totalorder %s28, 1
      %p277 = por %p275, %p276
      %p278 = scmp.ne.s32.totalorder %s269, %s270
      %p279 = scmp.eq.s32.totalorder %s28, 0
      %p280 = por %p278, %p279
      %p281 = scmp.ne.s32.totalorder %s269, %s270
      %p282 = scmp.eq.s32.totalorder %s29, 1
      %p283 = por %p281, %p282
      %p285 = scmp.ne.s32.totalorder %s270, %s284
      %p286 = scmp.eq.s32.totalorder %s29, 0
      %p287 = por %p285, %p286
      %s289 = sadd.s32 %s288, 1
      %p292 = scmp.eq.s32.totalorder %s23, 1
      %p293 = scmp.ne.s32.totalorder %s288, %s290
      %p294 = scmp.eq.s32.totalorder %s23, 0
      %p295 = por %p293, %p294
      %p296 = scmp.ne.s32.totalorder %s288, %s290
      %p297 = scmp.eq.s32.totalorder %s28, 1
      %p298 = por %p296, %p297
      %p299 = scmp.ne.s32.totalorder %s290, %s291
      %p300 = scmp.eq.s32.totalorder %s28, 0
      %p301 = por %p299, %p300
      %p302 = scmp.ne.s32.totalorder %s290, %s291
      %p303 = scmp.eq.s32.totalorder %s29, 1
      %p304 = por %p302, %p303
      %p306 = scmp.ne.s32.totalorder %s291, %s305
      %p307 = scmp.eq.s32.totalorder %s29, 0
      %p308 = por %p306, %p307
      %s310 = sadd.s32 %s309, 1
      %p313 = scmp.eq.s32.totalorder %s23, 1
      %p314 = scmp.ne.s32.totalorder %s309, %s311
      %p315 = scmp.eq.s32.totalorder %s23, 0
      %p316 = por %p314, %p315
      %p317 = scmp.ne.s32.totalorder %s309, %s311
      %p318 = scmp.eq.s32.totalorder %s28, 1
      %p319 = por %p317, %p318
      %p320 = scmp.ne.s32.totalorder %s311, %s312
      %p321 = scmp.eq.s32.totalorder %s28, 0
      %p322 = por %p320, %p321
      %p323 = scmp.ne.s32.totalorder %s311, %s312
      %p324 = scmp.eq.s32.totalorder %s29, 1
      %p325 = por %p323, %p324
      %p327 = scmp.ne.s32.totalorder %s312, %s326
      %p328 = scmp.eq.s32.totalorder %s29, 0
      %p329 = por %p327, %p328
      %s330 = ssub.s32 %s23, %s30
      %p331 = scmp.eq.s32.totalorder %s330, 0
      %s333 = sadd.s32 %s332, 1
      %s334 = scalar_select %p331, %s332, %s333
      %p337 = pneg %p331
      %p338 = scmp.eq.s32.totalorder %s23, 1
      %p339 = por %p337, %p338
      %p340 = scmp.ne.s32.totalorder %s332, %s335
      %p341 = scmp.eq.s32.totalorder %s23, 0
      %p342 = por %p340, %p341
      %p343 = scmp.ne.s32.totalorder %s332, %s335
      %p344 = scmp.eq.s32.totalorder %s28, 1
      %p345 = por %p343, %p344
      %p346 = scmp.ne.s32.totalorder %s335, %s336
      %p347 = scmp.eq.s32.totalorder %s28, 0
      %p348 = por %p346, %p347
      %p349 = scmp.ne.s32.totalorder %s335, %s336
      %p350 = scmp.eq.s32.totalorder %s29, 1
      %p351 = por %p349, %p350
      %p353 = scmp.ne.s32.totalorder %s336, %s352
      %p354 = scmp.eq.s32.totalorder %s29, 0
      %p355 = por %p353, %p354
      %p356 = scmp.le.s32.totalorder 1, %s23
      %p357 = scmp.lt.s32.totalorder %s23, 3
      %p358 = pnand %p356, %p357
      %p359 = pneg %p358
      // Predicated region
      $region9: #{tpu_custom_call.1} parent=5 // pred_check
        _
      $region10: #{tpu_custom_call.1} parent=5 // pred_check_branch
        %361 = sbr.rel (%p358) target = $region12
      $region11: #{tpu_custom_call.1} parent=5 // pred_region
        %s362 = ssub.s32 %s23, 1
        // Predicated region
        $region13: #{tpu_custom_call.1} parent=11 // pred_check
          %p363 = pneg %p70
        $region14: #{tpu_custom_call.1} parent=11 // pred_check_branch
          %365 = sbr.rel (%p363) target = $region16
        $region15: #{tpu_custom_call.1} parent=11 // pred_region
          _
        $region16: #{tpu_custom_call.1} parent=11 // pred_fallthru
          _
        // Predicated region
        $region17: #{tpu_custom_call.1} parent=11 // pred_check
          %p366 = pneg %p91
        $region18: #{tpu_custom_call.1} parent=11 // pred_check_branch
          %368 = sbr.rel (%p366) target = $region20
        $region19: #{tpu_custom_call.1} parent=11 // pred_region
          _
        $region20: #{tpu_custom_call.1} parent=11 // pred_fallthru
          _
        // Predicated region
        $region21: #{tpu_custom_call.1} parent=11 // pred_check
          %p369 = pneg %p112
        $region22: #{tpu_custom_call.1} parent=11 // pred_check_branch
          %371 = sbr.rel (%p369) target = $region24
        $region23: #{tpu_custom_call.1} parent=11 // pred_region
          _
        $region24: #{tpu_custom_call.1} parent=11 // pred_fallthru
          _
        // Predicated region
        $region25: #{tpu_custom_call.1} parent=11 // pred_check
          %p372 = pneg %p133
        $region26: #{tpu_custom_call.1} parent=11 // pred_check_branch
          %374 = sbr.rel (%p372) target = $region28
        $region27: #{tpu_custom_call.1} parent=11 // pred_region
          _
        $region28: #{tpu_custom_call.1} parent=11 // pred_fallthru
          _
        // Predicated region
        $region29: #{tpu_custom_call.1} parent=11 // pred_check
          %p375 = pneg %p154
        $region30: #{tpu_custom_call.1} parent=11 // pred_check_branch
          %377 = sbr.rel (%p375) target = $region32
        $region31: #{tpu_custom_call.1} parent=11 // pred_region
          _
        $region32: #{tpu_custom_call.1} parent=11 // pred_fallthru
          _
        // Predicated region
        $region33: #{tpu_custom_call.1} parent=11 // pred_check
          %p378 = pneg %p175
        $region34: #{tpu_custom_call.1} parent=11 // pred_check_branch
          %380 = sbr.rel (%p378) target = $region36
        $region35: #{tpu_custom_call.1} parent=11 // pred_region
          _
        $region36: #{tpu_custom_call.1} parent=11 // pred_fallthru
          _
        // Predicated region
        $region37: #{tpu_custom_call.1} parent=11 // pred_check
          %p381 = pneg %p196
        $region38: #{tpu_custom_call.1} parent=11 // pred_check_branch
          %383 = sbr.rel (%p381) target = $region40
        $region39: #{tpu_custom_call.1} parent=11 // pred_region
          _
        $region40: #{tpu_custom_call.1} parent=11 // pred_fallthru
          _
        // Predicated region
        $region41: #{tpu_custom_call.1} parent=11 // pred_check
          %p384 = pneg %p217
        $region42: #{tpu_custom_call.1} parent=11 // pred_check_branch
          %386 = sbr.rel (%p384) target = $region44
        $region43: #{tpu_custom_call.1} parent=11 // pred_region
          _
        $region44: #{tpu_custom_call.1} parent=11 // pred_fallthru
          _
        // Predicated region
        $region45: #{tpu_custom_call.1} parent=11 // pred_check
          %p387 = pneg %p238
        $region46: #{tpu_custom_call.1} parent=11 // pred_check_branch
          %389 = sbr.rel (%p387) target = $region48
        $region47: #{tpu_custom_call.1} parent=11 // pred_region
          _
        $region48: #{tpu_custom_call.1} parent=11 // pred_fallthru
          _
        // Predicated region
        $region49: #{tpu_custom_call.1} parent=11 // pred_check
          %p390 = pneg %p259
        $region50: #{tpu_custom_call.1} parent=11 // pred_check_branch
          %392 = sbr.rel (%p390) target = $region52
        $region51: #{tpu_custom_call.1} parent=11 // pred_region
          _
        $region52: #{tpu_custom_call.1} parent=11 // pred_fallthru
          _
        // Predicated region
        $region53: #{tpu_custom_call.1} parent=11 // pred_check
          %p393 = pneg %p280
        $region54: #{tpu_custom_call.1} parent=11 // pred_check_branch
          %395 = sbr.rel (%p393) target = $region56
        $region55: #{tpu_custom_call.1} parent=11 // pred_region
          _
        $region56: #{tpu_custom_call.1} parent=11 // pred_fallthru
          _
        // Predicated region
        $region57: #{tpu_custom_call.1} parent=11 // pred_check
          %p396 = pneg %p301
        $region58: #{tpu_custom_call.1} parent=11 // pred_check_branch
          %398 = sbr.rel (%p396) target = $region60
        $region59: #{tpu_custom_call.1} parent=11 // pred_region
          _
        $region60: #{tpu_custom_call.1} parent=11 // pred_fallthru
          _
        // Predicated region
        $region61: #{tpu_custom_call.1} parent=11 // pred_check
          %p399 = pneg %p322
        $region62: #{tpu_custom_call.1} parent=11 // pred_check_branch
          %401 = sbr.rel (%p399) target = $region64
        $region63: #{tpu_custom_call.1} parent=11 // pred_region
          _
        $region64: #{tpu_custom_call.1} parent=11 // pred_fallthru
          _
      $region12: #{tpu_custom_call.1} parent=5 // pred_fallthru
        _
      %p402 = scmp.lt.s32.totalorder %s23, 2
      // Predicated region
      $region65: #{tpu_custom_call.1} parent=5 // pred_check
        %p403 = pneg %p402
      $region66: #{tpu_custom_call.1} parent=5 // pred_check_branch
        %405 = sbr.rel (%p403) target = $region68
      $region67: #{tpu_custom_call.1} parent=5 // pred_region
        // Predicated region
        $region69: #{tpu_custom_call.1} parent=67 // pred_check
          %p406 = pneg %p43
        $region70: #{tpu_custom_call.1} parent=67 // pred_check_branch
          %408 = sbr.rel (%p406) target = $region72
        $region71: #{tpu_custom_call.1} parent=67 // pred_region
          %p409 = scmp.lt.s32.totalorder %s23, 1
          %s410 = scalar_select %p409, %s23, 1
          %s411 = smul.addr %s410, 4
          %s412 = scalar_lea.vmem %s0, %s411
        $region72: #{tpu_custom_call.1} parent=67 // pred_fallthru
          _
      $region68: #{tpu_custom_call.1} parent=5 // pred_fallthru
        _
      %p413 = scmp.le.s32.totalorder 1, %s23
      %p414 = scmp.lt.s32.totalorder %s23, 3
      %p415 = pnand %p413, %p414
      %p416 = pneg %p415
      // Predicated region
      $region73: #{tpu_custom_call.1} parent=5 // pred_check
        _
      $region74: #{tpu_custom_call.1} parent=5 // pred_check_branch
        %418 = sbr.rel (%p415) target = $region76
      $region75: #{tpu_custom_call.1} parent=5 // pred_region
        %s419 = ssub.s32 %s23, 1
        %p420 = scmp.lt.s32.totalorder %s28, 1
        %s421 = scalar_select %p420, %s28, 1
        %s422 = smul.addr %s421, 4
        %s423 = scalar_lea.vmem %s0, %s422
        %p424 = pneg %p49
        %p425 = pneg %p46
        %p426 = pneg %p70
        %p427 = pneg %p67
        %p428 = pneg %p91
        %p429 = pneg %p88
        %p430 = pneg %p112
        %p431 = pneg %p109
        %p432 = pneg %p133
        %p433 = pneg %p130
        %p434 = pneg %p154
        %p435 = pneg %p151
        %p436 = pneg %p175
        %p437 = pneg %p172
        %p438 = pneg %p196
        %p439 = pneg %p193
        %p440 = pneg %p217
        %p441 = pneg %p214
        %p442 = pneg %p238
        %p443 = pneg %p235
        %p444 = pneg %p259
        %p445 = pneg %p256
        %p446 = pneg %p280
        %p447 = pneg %p277
        %p448 = pneg %p301
        %p449 = pneg %p298
        %p450 = pneg %p322
        %p451 = pneg %p319
        %p452 = pneg %p348
        %p453 = pneg %p345
        %s454 = sand.u32 %s335, 1
        %s455 = scalar_lea.sflag [#allocation4], %s454
        %s456 = sand.u32 %s335, 1
        %s457 = smul.addr %s456, 8
        %s458 = scalar_lea.vmem [#allocation3], %s457
        %p459 = scmp.lt.s32.totalorder %s28, 1
        %s460 = scalar_select %p459, %s28, 1
        %s461 = smul.addr %s460, 4
        %s462 = scalar_lea.vmem %s0, %s461
        %vm463 = vcmask 162816
        %464 = vst.msk [vmem:[#allocation2] sm:$0xff] %vm463, 0.0
        %v465 = vld [vmem:[%s462] sm:$0xf]
        %s466 = scalar_lea.vmem %s1, %s28
        %v467 = vld [vmem:[%s466] sm:$0x1]
        %v468 = vld [vmem:[%s10] sm:$0xff]
        %v469 = vmax.f32 %v467, 0.0
        %v470 = vand.u32 2147483647, %v467
        %v471 = vsub.f32 0.0, %v470
        %v472 = vmul.f32 %v471, 1.442695
        %v473 = vpow.pop %v472
        %v474 = vadd.f32 %v473, 1.0
        %v475 = vlog2.pop %v474
        %v476 = vmul.f32 %v475, 0.6931472
        %v477 = vadd.f32 %v469, %v476
        %v478 = vtanh.pop %v477
        %v479 = vmul.f32 %v467, %v478
        %v480 = vperm.slane %v479, 0
        %v481 = vmul.f32 %v468, %v480
        %vm482 = vcmask 261120
        %v483 = vsel %vm482, %v481, 0.0
        %484 = vadd.xlane.f32.xlu0 %v483
        %v485 = vpop.xlane.xlu0 %484
        %v486 = vld [vmem:[%s11] sm:$0xff]
        %v487 = vadd.f32 %v485, %v486
        %v488 = vld [vmem:[%s3] sm:$0xff]
        %490 = vrot.lane.b32.xlu0 %v465, 2
        %v491 = vpop.permute.xlu0 %490
        %vm493 = vcmask 142352
        %494 = vst.msk [vmem:[#allocation2] sm:$0xf] %vm493, %v491
        %v495 = vld [vmem:[#allocation2] sm:$0xf]
        %v496 = vld [vmem:[%s2] sm:$0xff]
        %s497 = scalar_lea.vmem %s2, 8
        %v498 = vld [vmem:[%s497] sm:$0xff]
        %500 = vrot.lane.b32.xlu0 %v495, 127
        %v501 = vpop.permute.xlu0 %500
        %vm502 = vcmask 31744
        %v504 = vsel %vm502, %v498, 0
        %vm506 = vcmask 1043456
        %v507 = vsel %vm506, %v501, 0
        %509 = vmatpush.msra.mxu0 0.0
        %510 = vmatpush.msra.mxu0 0.0
        %511 = vmatpush.msra.mxu0 0.0
        %512 = vmatpush.msra.mxu0 0.0
        %513 = vmatpush.msra.mxu0 0.0
        %514 = vmatpush.msra.mxu0 0.0
        %515 = vmatpush.msra.mxu0 0.0
        %516 = vmatpush.msra.mxu0 0.0
        %517 = vmatpush.msra.mxu0 0.0
        %518 = vmatpush.msra.mxu0 0.0
        %519 = vmatpush.msra.mxu0 0.0
        %520 = vmatpush.msra.mxu0 0.0
        %521 = vmatpush.msra.mxu0 0.0
        %522 = vmatpush.msra.mxu0 0.0
        %523 = vmatpush.msra.mxu0 0.0
        %v524 = vand.u32 %v507, 4294901760
        %525 = vmatpush.msra.mxu0 %v524
        %v526 = vand.u32 %v504, 4294901760
        %v527 = vsub.f32 %v504, %v526
        %v528 = vand.u32 %v527, 4294901760
        %v529 = vsub.f32 %v527, %v528
        %v530 = vand.u32 %v529, 4294901760
        %531 = vmatmul.f32.gmra.mxu0 %v530
        %v532 = vpop.f32.mrf.mxu0
        %v533 = vadd.f32 0.0, %v532
        %534 = vdwg.mxu0
        %535 = vmatpush.msra.mxu0 0.0
        %536 = vmatpush.msra.mxu0 0.0
        %537 = vmatpush.msra.mxu0 0.0
        %538 = vmatpush.msra.mxu0 0.0
        %539 = vmatpush.msra.mxu0 0.0
        %540 = vmatpush.msra.mxu0 0.0
        %541 = vmatpush.msra.mxu0 0.0
        %542 = vmatpush.msra.mxu0 0.0
        %543 = vmatpush.msra.mxu0 0.0
        %544 = vmatpush.msra.mxu0 0.0
        %545 = vmatpush.msra.mxu0 0.0
        %546 = vmatpush.msra.mxu0 0.0
        %547 = vmatpush.msra.mxu0 0.0
        %548 = vmatpush.msra.mxu0 0.0
        %549 = vmatpush.msra.mxu0 0.0
        %v550 = vand.u32 %v507, 4294901760
        %v551 = vsub.f32 %v507, %v550
        %v552 = vand.u32 %v551, 4294901760
        %v553 = vsub.f32 %v551, %v552
        %v554 = vand.u32 %v553, 4294901760
        %555 = vmatpush.msra.mxu0 %v554
        %v556 = vand.u32 %v504, 4294901760
        %557 = vmatmul.f32.gmra.mxu0 %v556
        %v558 = vpop.f32.mrf.mxu0
        %v559 = vadd.f32 %v533, %v558
        %560 = vdwg.mxu0
        %561 = vmatpush.msra.mxu0 0.0
        %562 = vmatpush.msra.mxu0 0.0
        %563 = vmatpush.msra.mxu0 0.0
        %564 = vmatpush.msra.mxu0 0.0
        %565 = vmatpush.msra.mxu0 0.0
        %566 = vmatpush.msra.mxu0 0.0
        %567 = vmatpush.msra.mxu0 0.0
        %568 = vmatpush.msra.mxu0 0.0
        %569 = vmatpush.msra.mxu0 0.0
        %570 = vmatpush.msra.mxu0 0.0
        %571 = vmatpush.msra.mxu0 0.0
        %572 = vmatpush.msra.mxu0 0.0
        %573 = vmatpush.msra.mxu0 0.0
        %574 = vmatpush.msra.mxu0 0.0
        %575 = vmatpush.msra.mxu0 0.0
        %v576 = vand.u32 %v507, 4294901760
        %v577 = vsub.f32 %v507, %v576
        %578 = vmatpush.msra.mxu0 %v577
        %v579 = vand.u32 %v504, 4294901760
        %v580 = vsub.f32 %v504, %v579
        %581 = vmatmul.f32.gmra.mxu0 %v580
        %v582 = vpop.f32.mrf.mxu0
        %v583 = vadd.f32 %v559, %v582
        %584 = vdwg.mxu0
        %585 = vmatpush.msra.mxu0 0.0
        %586 = vmatpush.msra.mxu0 0.0
        %587 = vmatpush.msra.mxu0 0.0
        %588 = vmatpush.msra.mxu0 0.0
        %589 = vmatpush.msra.mxu0 0.0
        %590 = vmatpush.msra.mxu0 0.0
        %591 = vmatpush.msra.mxu0 0.0
        %592 = vmatpush.msra.mxu0 0.0
        %593 = vmatpush.msra.mxu0 0.0
        %594 = vmatpush.msra.mxu0 0.0
        %595 = vmatpush.msra.mxu0 0.0
        %596 = vmatpush.msra.mxu0 0.0
        %597 = vmatpush.msra.mxu0 0.0
        %598 = vmatpush.msra.mxu0 0.0
        %599 = vmatpush.msra.mxu0 0.0
        %v600 = vand.u32 %v507, 4294901760
        %601 = vmatpush.msra.mxu0 %v600
        %v602 = vand.u32 %v504, 4294901760
        %v603 = vsub.f32 %v504, %v602
        %v604 = vand.u32 %v603, 4294901760
        %605 = vmatmul.f32.gmra.mxu0 %v604
        %v606 = vpop.f32.mrf.mxu0
        %v607 = vadd.f32 %v583, %v606
        %608 = vdwg.mxu0
        %609 = vmatpush.msra.mxu0 0.0
        %610 = vmatpush.msra.mxu0 0.0
        %611 = vmatpush.msra.mxu0 0.0
        %612 = vmatpush.msra.mxu0 0.0
        %613 = vmatpush.msra.mxu0 0.0
        %614 = vmatpush.msra.mxu0 0.0
        %615 = vmatpush.msra.mxu0 0.0
        %616 = vmatpush.msra.mxu0 0.0
        %617 = vmatpush.msra.mxu0 0.0
        %618 = vmatpush.msra.mxu0 0.0
        %619 = vmatpush.msra.mxu0 0.0
        %620 = vmatpush.msra.mxu0 0.0
        %621 = vmatpush.msra.mxu0 0.0
        %622 = vmatpush.msra.mxu0 0.0
        %623 = vmatpush.msra.mxu0 0.0
        %v624 = vand.u32 %v507, 4294901760
        %v625 = vsub.f32 %v507, %v624
        %v626 = vand.u32 %v625, 4294901760
        %627 = vmatpush.msra.mxu0 %v626
        %v628 = vand.u32 %v504, 4294901760
        %629 = vmatmul.f32.gmra.mxu0 %v628
        %v630 = vpop.f32.mrf.mxu0
        %v631 = vadd.f32 %v607, %v630
        %632 = vdwg.mxu0
        %633 = vmatpush.msra.mxu0 0.0
        %634 = vmatpush.msra.mxu0 0.0
        %635 = vmatpush.msra.mxu0 0.0
        %636 = vmatpush.msra.mxu0 0.0
        %637 = vmatpush.msra.mxu0 0.0
        %638 = vmatpush.msra.mxu0 0.0
        %639 = vmatpush.msra.mxu0 0.0
        %640 = vmatpush.msra.mxu0 0.0
        %641 = vmatpush.msra.mxu0 0.0
        %642 = vmatpush.msra.mxu0 0.0
        %643 = vmatpush.msra.mxu0 0.0
        %644 = vmatpush.msra.mxu0 0.0
        %645 = vmatpush.msra.mxu0 0.0
        %646 = vmatpush.msra.mxu0 0.0
        %647 = vmatpush.msra.mxu0 0.0
        %v648 = vand.u32 %v507, 4294901760
        %649 = vmatpush.msra.mxu0 %v648
        %v650 = vand.u32 %v504, 4294901760
        %651 = vmatmul.f32.gmra.mxu0 %v650
        %v652 = vpop.f32.mrf.mxu0
        %v653 = vadd.f32 %v631, %v652
        %654 = vdwg.mxu0
        %v656 = vsel %vm502, %v496, 0
        %v658 = vsel %vm506, %v495, 0
        %660 = vmatpush.msra.mxu0 0.0
        %661 = vmatpush.msra.mxu0 0.0
        %662 = vmatpush.msra.mxu0 0.0
        %663 = vmatpush.msra.mxu0 0.0
        %664 = vmatpush.msra.mxu0 0.0
        %665 = vmatpush.msra.mxu0 0.0
        %666 = vmatpush.msra.mxu0 0.0
        %667 = vmatpush.msra.mxu0 0.0
        %668 = vmatpush.msra.mxu0 0.0
        %669 = vmatpush.msra.mxu0 0.0
        %670 = vmatpush.msra.mxu0 0.0
        %671 = vmatpush.msra.mxu0 0.0
        %672 = vmatpush.msra.mxu0 0.0
        %673 = vmatpush.msra.mxu0 0.0
        %674 = vmatpush.msra.mxu0 0.0
        %v675 = vand.u32 %v658, 4294901760
        %676 = vmatpush.msra.mxu0 %v675
        %v677 = vand.u32 %v656, 4294901760
        %v678 = vsub.f32 %v656, %v677
        %v679 = vand.u32 %v678, 4294901760
        %v680 = vsub.f32 %v678, %v679
        %v681 = vand.u32 %v680, 4294901760
        %682 = vmatmul.f32.gmra.mxu0 %v681
        %v683 = vpop.f32.mrf.mxu0
        %v684 = vadd.f32 %v653, %v683
        %685 = vdwg.mxu0
        %686 = vmatpush.msra.mxu0 0.0
        %687 = vmatpush.msra.mxu0 0.0
        %688 = vmatpush.msra.mxu0 0.0
        %689 = vmatpush.msra.mxu0 0.0
        %690 = vmatpush.msra.mxu0 0.0
        %691 = vmatpush.msra.mxu0 0.0
        %692 = vmatpush.msra.mxu0 0.0
        %693 = vmatpush.msra.mxu0 0.0
        %694 = vmatpush.msra.mxu0 0.0
        %695 = vmatpush.msra.mxu0 0.0
        %696 = vmatpush.msra.mxu0 0.0
        %697 = vmatpush.msra.mxu0 0.0
        %698 = vmatpush.msra.mxu0 0.0
        %699 = vmatpush.msra.mxu0 0.0
        %700 = vmatpush.msra.mxu0 0.0
        %v701 = vand.u32 %v658, 4294901760
        %v702 = vsub.f32 %v658, %v701
        %v703 = vand.u32 %v702, 4294901760
        %v704 = vsub.f32 %v702, %v703
        %v705 = vand.u32 %v704, 4294901760
        %706 = vmatpush.msra.mxu0 %v705
        %v707 = vand.u32 %v656, 4294901760
        %708 = vmatmul.f32.gmra.mxu0 %v707
        %v709 = vpop.f32.mrf.mxu0
        %v710 = vadd.f32 %v684, %v709
        %711 = vdwg.mxu0
        %712 = vmatpush.msra.mxu0 0.0
        %713 = vmatpush.msra.mxu0 0.0
        %714 = vmatpush.msra.mxu0 0.0
        %715 = vmatpush.msra.mxu0 0.0
        %716 = vmatpush.msra.mxu0 0.0
        %717 = vmatpush.msra.mxu0 0.0
        %718 = vmatpush.msra.mxu0 0.0
        %719 = vmatpush.msra.mxu0 0.0
        %720 = vmatpush.msra.mxu0 0.0
        %721 = vmatpush.msra.mxu0 0.0
        %722 = vmatpush.msra.mxu0 0.0
        %723 = vmatpush.msra.mxu0 0.0
        %724 = vmatpush.msra.mxu0 0.0
        %725 = vmatpush.msra.mxu0 0.0
        %726 = vmatpush.msra.mxu0 0.0
        %v727 = vand.u32 %v658, 4294901760
        %v728 = vsub.f32 %v658, %v727
        %729 = vmatpush.msra.mxu0 %v728
        %v730 = vand.u32 %v656, 4294901760
        %v731 = vsub.f32 %v656, %v730
        %732 = vmatmul.f32.gmra.mxu0 %v731
        %v733 = vpop.f32.mrf.mxu0
        %v734 = vadd.f32 %v710, %v733
        %735 = vdwg.mxu0
        %736 = vmatpush.msra.mxu0 0.0
        %737 = vmatpush.msra.mxu0 0.0
        %738 = vmatpush.msra.mxu0 0.0
        %739 = vmatpush.msra.mxu0 0.0
        %740 = vmatpush.msra.mxu0 0.0
        %741 = vmatpush.msra.mxu0 0.0
        %742 = vmatpush.msra.mxu0 0.0
        %743 = vmatpush.msra.mxu0 0.0
        %744 = vmatpush.msra.mxu0 0.0
        %745 = vmatpush.msra.mxu0 0.0
        %746 = vmatpush.msra.mxu0 0.0
        %747 = vmatpush.msra.mxu0 0.0
        %748 = vmatpush.msra.mxu0 0.0
        %749 = vmatpush.msra.mxu0 0.0
        %750 = vmatpush.msra.mxu0 0.0
        %v751 = vand.u32 %v658, 4294901760
        %752 = vmatpush.msra.mxu0 %v751
        %v753 = vand.u32 %v656, 4294901760
        %v754 = vsub.f32 %v656, %v753
        %v755 = vand.u32 %v754, 4294901760
        %756 = vmatmul.f32.gmra.mxu0 %v755
        %v757 = vpop.f32.mrf.mxu0
        %v758 = vadd.f32 %v734, %v757
        %759 = vdwg.mxu0
        %760 = vmatpush.msra.mxu0 0.0
        %761 = vmatpush.msra.mxu0 0.0
        %762 = vmatpush.msra.mxu0 0.0
        %763 = vmatpush.msra.mxu0 0.0
        %764 = vmatpush.msra.mxu0 0.0
        %765 = vmatpush.msra.mxu0 0.0
        %766 = vmatpush.msra.mxu0 0.0
        %767 = vmatpush.msra.mxu0 0.0
        %768 = vmatpush.msra.mxu0 0.0
        %769 = vmatpush.msra.mxu0 0.0
        %770 = vmatpush.msra.mxu0 0.0
        %771 = vmatpush.msra.mxu0 0.0
        %772 = vmatpush.msra.mxu0 0.0
        %773 = vmatpush.msra.mxu0 0.0
        %774 = vmatpush.msra.mxu0 0.0
        %v775 = vand.u32 %v658, 4294901760
        %v776 = vsub.f32 %v658, %v775
        %v777 = vand.u32 %v776, 4294901760
        %778 = vmatpush.msra.mxu0 %v777
        %v779 = vand.u32 %v656, 4294901760
        %780 = vmatmul.f32.gmra.mxu0 %v779
        %v781 = vpop.f32.mrf.mxu0
        %v782 = vadd.f32 %v758, %v781
        %783 = vdwg.mxu0
        %784 = vmatpush.msra.mxu0 0.0
        %785 = vmatpush.msra.mxu0 0.0
        %786 = vmatpush.msra.mxu0 0.0
        %787 = vmatpush.msra.mxu0 0.0
        %788 = vmatpush.msra.mxu0 0.0
        %789 = vmatpush.msra.mxu0 0.0
        %790 = vmatpush.msra.mxu0 0.0
        %791 = vmatpush.msra.mxu0 0.0
        %792 = vmatpush.msra.mxu0 0.0
        %793 = vmatpush.msra.mxu0 0.0
        %794 = vmatpush.msra.mxu0 0.0
        %795 = vmatpush.msra.mxu0 0.0
        %796 = vmatpush.msra.mxu0 0.0
        %797 = vmatpush.msra.mxu0 0.0
        %798 = vmatpush.msra.mxu0 0.0
        %v799 = vand.u32 %v658, 4294901760
        %800 = vmatpush.msra.mxu0 %v799
        %v801 = vand.u32 %v656, 4294901760
        %802 = vmatmul.f32.gmra.mxu0 %v801
        %v803 = vpop.f32.mrf.mxu0
        %v804 = vadd.f32 %v782, %v803
        %805 = vdwg.mxu0
        %s806 = scalar_lea.vmem %s2, 16
        %v807 = vld [vmem:[%s806] sm:$0xff]
        %808 = vrot.lane.b32.xlu0 %v495, 126
        %v809 = vpop.permute.xlu0 %808
        %v811 = vsel %vm502, %v807, 0
        %v813 = vsel %vm506, %v809, 0
        %815 = vmatpush.msra.mxu0 0.0
        %816 = vmatpush.msra.mxu0 0.0
        %817 = vmatpush.msra.mxu0 0.0
        %818 = vmatpush.msra.mxu0 0.0
        %819 = vmatpush.msra.mxu0 0.0
        %820 = vmatpush.msra.mxu0 0.0
        %821 = vmatpush.msra.mxu0 0.0
        %822 = vmatpush.msra.mxu0 0.0
        %823 = vmatpush.msra.mxu0 0.0
        %824 = vmatpush.msra.mxu0 0.0
        %825 = vmatpush.msra.mxu0 0.0
        %826 = vmatpush.msra.mxu0 0.0
        %827 = vmatpush.msra.mxu0 0.0
        %828 = vmatpush.msra.mxu0 0.0
        %829 = vmatpush.msra.mxu0 0.0
        %v830 = vand.u32 %v813, 4294901760
        %831 = vmatpush.msra.mxu0 %v830
        %v832 = vand.u32 %v811, 4294901760
        %v833 = vsub.f32 %v811, %v832
        %v834 = vand.u32 %v833, 4294901760
        %v835 = vsub.f32 %v833, %v834
        %v836 = vand.u32 %v835, 4294901760
        %837 = vmatmul.f32.gmra.mxu0 %v836
        %v838 = vpop.f32.mrf.mxu0
        %v839 = vadd.f32 0.0, %v838
        %840 = vdwg.mxu0
        %841 = vmatpush.msra.mxu0 0.0
        %842 = vmatpush.msra.mxu0 0.0
        %843 = vmatpush.msra.mxu0 0.0
        %844 = vmatpush.msra.mxu0 0.0
        %845 = vmatpush.msra.mxu0 0.0
        %846 = vmatpush.msra.mxu0 0.0
        %847 = vmatpush.msra.mxu0 0.0
        %848 = vmatpush.msra.mxu0 0.0
        %849 = vmatpush.msra.mxu0 0.0
        %850 = vmatpush.msra.mxu0 0.0
        %851 = vmatpush.msra.mxu0 0.0
        %852 = vmatpush.msra.mxu0 0.0
        %853 = vmatpush.msra.mxu0 0.0
        %854 = vmatpush.msra.mxu0 0.0
        %855 = vmatpush.msra.mxu0 0.0
        %v856 = vand.u32 %v813, 4294901760
        %v857 = vsub.f32 %v813, %v856
        %v858 = vand.u32 %v857, 4294901760
        %v859 = vsub.f32 %v857, %v858
        %v860 = vand.u32 %v859, 4294901760
        %861 = vmatpush.msra.mxu0 %v860
        %v862 = vand.u32 %v811, 4294901760
        %863 = vmatmul.f32.gmra.mxu0 %v862
        %v864 = vpop.f32.mrf.mxu0
        %v865 = vadd.f32 %v839, %v864
        %866 = vdwg.mxu0
        %867 = vmatpush.msra.mxu0 0.0
        %868 = vmatpush.msra.mxu0 0.0
        %869 = vmatpush.msra.mxu0 0.0
        %870 = vmatpush.msra.mxu0 0.0
        %871 = vmatpush.msra.mxu0 0.0
        %872 = vmatpush.msra.mxu0 0.0
        %873 = vmatpush.msra.mxu0 0.0
        %874 = vmatpush.msra.mxu0 0.0
        %875 = vmatpush.msra.mxu0 0.0
        %876 = vmatpush.msra.mxu0 0.0
        %877 = vmatpush.msra.mxu0 0.0
        %878 = vmatpush.msra.mxu0 0.0
        %879 = vmatpush.msra.mxu0 0.0
        %880 = vmatpush.msra.mxu0 0.0
        %881 = vmatpush.msra.mxu0 0.0
        %v882 = vand.u32 %v813, 4294901760
        %v883 = vsub.f32 %v813, %v882
        %884 = vmatpush.msra.mxu0 %v883
        %v885 = vand.u32 %v811, 4294901760
        %v886 = vsub.f32 %v811, %v885
        %887 = vmatmul.f32.gmra.mxu0 %v886
        %v888 = vpop.f32.mrf.mxu0
        %v889 = vadd.f32 %v865, %v888
        %890 = vdwg.mxu0
        %891 = vmatpush.msra.mxu0 0.0
        %892 = vmatpush.msra.mxu0 0.0
        %893 = vmatpush.msra.mxu0 0.0
        %894 = vmatpush.msra.mxu0 0.0
        %895 = vmatpush.msra.mxu0 0.0
        %896 = vmatpush.msra.mxu0 0.0
        %897 = vmatpush.msra.mxu0 0.0
        %898 = vmatpush.msra.mxu0 0.0
        %899 = vmatpush.msra.mxu0 0.0
        %900 = vmatpush.msra.mxu0 0.0
        %901 = vmatpush.msra.mxu0 0.0
        %902 = vmatpush.msra.mxu0 0.0
        %903 = vmatpush.msra.mxu0 0.0
        %904 = vmatpush.msra.mxu0 0.0
        %905 = vmatpush.msra.mxu0 0.0
        %v906 = vand.u32 %v813, 4294901760
        %907 = vmatpush.msra.mxu0 %v906
        %v908 = vand.u32 %v811, 4294901760
        %v909 = vsub.f32 %v811, %v908
        %v910 = vand.u32 %v909, 4294901760
        %911 = vmatmul.f32.gmra.mxu0 %v910
        %v912 = vpop.f32.mrf.mxu0
        %v913 = vadd.f32 %v889, %v912
        %914 = vdwg.mxu0
        %915 = vmatpush.msra.mxu0 0.0
        %916 = vmatpush.msra.mxu0 0.0
        %917 = vmatpush.msra.mxu0 0.0
        %918 = vmatpush.msra.mxu0 0.0
        %919 = vmatpush.msra.mxu0 0.0
        %920 = vmatpush.msra.mxu0 0.0
        %921 = vmatpush.msra.mxu0 0.0
        %922 = vmatpush.msra.mxu0 0.0
        %923 = vmatpush.msra.mxu0 0.0
        %924 = vmatpush.msra.mxu0 0.0
        %925 = vmatpush.msra.mxu0 0.0
        %926 = vmatpush.msra.mxu0 0.0
        %927 = vmatpush.msra.mxu0 0.0
        %928 = vmatpush.msra.mxu0 0.0
        %929 = vmatpush.msra.mxu0 0.0
        %v930 = vand.u32 %v813, 4294901760
        %v931 = vsub.f32 %v813, %v930
        %v932 = vand.u32 %v931, 4294901760
        %933 = vmatpush.msra.mxu0 %v932
        %v934 = vand.u32 %v811, 4294901760
        %935 = vmatmul.f32.gmra.mxu0 %v934
        %v936 = vpop.f32.mrf.mxu0
        %v937 = vadd.f32 %v913, %v936
        %938 = vdwg.mxu0
        %939 = vmatpush.msra.mxu0 0.0
        %940 = vmatpush.msra.mxu0 0.0
        %941 = vmatpush.msra.mxu0 0.0
        %942 = vmatpush.msra.mxu0 0.0
        %943 = vmatpush.msra.mxu0 0.0
        %944 = vmatpush.msra.mxu0 0.0
        %945 = vmatpush.msra.mxu0 0.0
        %946 = vmatpush.msra.mxu0 0.0
        %947 = vmatpush.msra.mxu0 0.0
        %948 = vmatpush.msra.mxu0 0.0
        %949 = vmatpush.msra.mxu0 0.0
        %950 = vmatpush.msra.mxu0 0.0
        %951 = vmatpush.msra.mxu0 0.0
        %952 = vmatpush.msra.mxu0 0.0
        %953 = vmatpush.msra.mxu0 0.0
        %v954 = vand.u32 %v813, 4294901760
        %955 = vmatpush.msra.mxu0 %v954
        %v956 = vand.u32 %v811, 4294901760
        %957 = vmatmul.f32.gmra.mxu0 %v956
        %v958 = vpop.f32.mrf.mxu0
        %v959 = vadd.f32 %v937, %v958
        %960 = vdwg.mxu0
        %v961 = vadd.f32 %v804, %v959
        %s962 = scalar_lea.vmem %s2, 24
        %v963 = vld [vmem:[%s962] sm:$0xff]
        %964 = vrot.lane.b32.xlu0 %v495, 125
        %v965 = vpop.permute.xlu0 %964
        %v967 = vsel %vm502, %v963, 0
        %v969 = vsel %vm506, %v965, 0
        %971 = vmatpush.msra.mxu0 0.0
        %972 = vmatpush.msra.mxu0 0.0
        %973 = vmatpush.msra.mxu0 0.0
        %974 = vmatpush.msra.mxu0 0.0
        %975 = vmatpush.msra.mxu0 0.0
        %976 = vmatpush.msra.mxu0 0.0
        %977 = vmatpush.msra.mxu0 0.0
        %978 = vmatpush.msra.mxu0 0.0
        %979 = vmatpush.msra.mxu0 0.0
        %980 = vmatpush.msra.mxu0 0.0
        %981 = vmatpush.msra.mxu0 0.0
        %982 = vmatpush.msra.mxu0 0.0
        %983 = vmatpush.msra.mxu0 0.0
        %984 = vmatpush.msra.mxu0 0.0
        %985 = vmatpush.msra.mxu0 0.0
        %v986 = vand.u32 %v969, 4294901760
        %987 = vmatpush.msra.mxu0 %v986
        %v988 = vand.u32 %v967, 4294901760
        %v989 = vsub.f32 %v967, %v988
        %v990 = vand.u32 %v989, 4294901760
        %v991 = vsub.f32 %v989, %v990
        %v992 = vand.u32 %v991, 4294901760
        %993 = vmatmul.f32.gmra.mxu0 %v992
        %v994 = vpop.f32.mrf.mxu0
        %v995 = vadd.f32 0.0, %v994
        %996 = vdwg.mxu0
        %997 = vmatpush.msra.mxu0 0.0
        %998 = vmatpush.msra.mxu0 0.0
        %999 = vmatpush.msra.mxu0 0.0
        %1000 = vmatpush.msra.mxu0 0.0
        %1001 = vmatpush.msra.mxu0 0.0
        %1002 = vmatpush.msra.mxu0 0.0
        %1003 = vmatpush.msra.mxu0 0.0
        %1004 = vmatpush.msra.mxu0 0.0
        %1005 = vmatpush.msra.mxu0 0.0
        %1006 = vmatpush.msra.mxu0 0.0
        %1007 = vmatpush.msra.mxu0 0.0
        %1008 = vmatpush.msra.mxu0 0.0
        %1009 = vmatpush.msra.mxu0 0.0
        %1010 = vmatpush.msra.mxu0 0.0
        %1011 = vmatpush.msra.mxu0 0.0
        %v1012 = vand.u32 %v969, 4294901760
        %v1013 = vsub.f32 %v969, %v1012
        %v1014 = vand.u32 %v1013, 4294901760
        %v1015 = vsub.f32 %v1013, %v1014
        %v1016 = vand.u32 %v1015, 4294901760
        %1017 = vmatpush.msra.mxu0 %v1016
        %v1018 = vand.u32 %v967, 4294901760
        %1019 = vmatmul.f32.gmra.mxu0 %v1018
        %v1020 = vpop.f32.mrf.mxu0
        %v1021 = vadd.f32 %v995, %v1020
        %1022 = vdwg.mxu0
        %1023 = vmatpush.msra.mxu0 0.0
        %1024 = vmatpush.msra.mxu0 0.0
        %1025 = vmatpush.msra.mxu0 0.0
        %1026 = vmatpush.msra.mxu0 0.0
        %1027 = vmatpush.msra.mxu0 0.0
        %1028 = vmatpush.msra.mxu0 0.0
        %1029 = vmatpush.msra.mxu0 0.0
        %1030 = vmatpush.msra.mxu0 0.0
        %1031 = vmatpush.msra.mxu0 0.0
        %1032 = vmatpush.msra.mxu0 0.0
        %1033 = vmatpush.msra.mxu0 0.0
        %1034 = vmatpush.msra.mxu0 0.0
        %1035 = vmatpush.msra.mxu0 0.0
        %1036 = vmatpush.msra.mxu0 0.0
        %1037 = vmatpush.msra.mxu0 0.0
        %v1038 = vand.u32 %v969, 4294901760
        %v1039 = vsub.f32 %v969, %v1038
        %1040 = vmatpush.msra.mxu0 %v1039
        %v1041 = vand.u32 %v967, 4294901760
        %v1042 = vsub.f32 %v967, %v1041
        %1043 = vmatmul.f32.gmra.mxu0 %v1042
        %v1044 = vpop.f32.mrf.mxu0
        %v1045 = vadd.f32 %v1021, %v1044
        %1046 = vdwg.mxu0
        %1047 = vmatpush.msra.mxu0 0.0
        %1048 = vmatpush.msra.mxu0 0.0
        %1049 = vmatpush.msra.mxu0 0.0
        %1050 = vmatpush.msra.mxu0 0.0
        %1051 = vmatpush.msra.mxu0 0.0
        %1052 = vmatpush.msra.mxu0 0.0
        %1053 = vmatpush.msra.mxu0 0.0
        %1054 = vmatpush.msra.mxu0 0.0
        %1055 = vmatpush.msra.mxu0 0.0
        %1056 = vmatpush.msra.mxu0 0.0
        %1057 = vmatpush.msra.mxu0 0.0
        %1058 = vmatpush.msra.mxu0 0.0
        %1059 = vmatpush.msra.mxu0 0.0
        %1060 = vmatpush.msra.mxu0 0.0
        %1061 = vmatpush.msra.mxu0 0.0
        %v1062 = vand.u32 %v969, 4294901760
        %1063 = vmatpush.msra.mxu0 %v1062
        %v1064 = vand.u32 %v967, 4294901760
        %v1065 = vsub.f32 %v967, %v1064
        %v1066 = vand.u32 %v1065, 4294901760
        %1067 = vmatmul.f32.gmra.mxu0 %v1066
        %v1068 = vpop.f32.mrf.mxu0
        %v1069 = vadd.f32 %v1045, %v1068
        %1070 = vdwg.mxu0
        %1071 = vmatpush.msra.mxu0 0.0
        %1072 = vmatpush.msra.mxu0 0.0
        %1073 = vmatpush.msra.mxu0 0.0
        %1074 = vmatpush.msra.mxu0 0.0
        %1075 = vmatpush.msra.mxu0 0.0
        %1076 = vmatpush.msra.mxu0 0.0
        %1077 = vmatpush.msra.mxu0 0.0
        %1078 = vmatpush.msra.mxu0 0.0
        %1079 = vmatpush.msra.mxu0 0.0
        %1080 = vmatpush.msra.mxu0 0.0
        %1081 = vmatpush.msra.mxu0 0.0
        %1082 = vmatpush.msra.mxu0 0.0
        %1083 = vmatpush.msra.mxu0 0.0
        %1084 = vmatpush.msra.mxu0 0.0
        %1085 = vmatpush.msra.mxu0 0.0
        %v1086 = vand.u32 %v969, 4294901760
        %v1087 = vsub.f32 %v969, %v1086
        %v1088 = vand.u32 %v1087, 4294901760
        %1089 = vmatpush.msra.mxu0 %v1088
        %v1090 = vand.u32 %v967, 4294901760
        %1091 = vmatmul.f32.gmra.mxu0 %v1090
        %v1092 = vpop.f32.mrf.mxu0
        %v1093 = vadd.f32 %v1069, %v1092
        %1094 = vdwg.mxu0
        %1095 = vmatpush.msra.mxu0 0.0
        %1096 = vmatpush.msra.mxu0 0.0
        %1097 = vmatpush.msra.mxu0 0.0
        %1098 = vmatpush.msra.mxu0 0.0
        %1099 = vmatpush.msra.mxu0 0.0
        %1100 = vmatpush.msra.mxu0 0.0
        %1101 = vmatpush.msra.mxu0 0.0
        %1102 = vmatpush.msra.mxu0 0.0
        %1103 = vmatpush.msra.mxu0 0.0
        %1104 = vmatpush.msra.mxu0 0.0
        %1105 = vmatpush.msra.mxu0 0.0
        %1106 = vmatpush.msra.mxu0 0.0
        %1107 = vmatpush.msra.mxu0 0.0
        %1108 = vmatpush.msra.mxu0 0.0
        %1109 = vmatpush.msra.mxu0 0.0
        %v1110 = vand.u32 %v969, 4294901760
        %1111 = vmatpush.msra.mxu0 %v1110
        %v1112 = vand.u32 %v967, 4294901760
        %1113 = vmatmul.f32.gmra.mxu0 %v1112
        %v1114 = vpop.f32.mrf.mxu0
        %v1115 = vadd.f32 %v1093, %v1114
        %1116 = vdwg.mxu0
        %v1117 = vadd.f32 %v961, %v1115
        %s1118 = scalar_lea.vmem %s2, 32
        %v1119 = vld [vmem:[%s1118] sm:$0xff]
        %1120 = vrot.lane.b32.xlu0 %v495, 124
        %v1121 = vpop.permute.xlu0 %1120
        %v1123 = vsel %vm502, %v1119, 0
        %v1125 = vsel %vm506, %v1121, 0
        %1127 = vmatpush.msra.mxu0 0.0
        %1128 = vmatpush.msra.mxu0 0.0
        %1129 = vmatpush.msra.mxu0 0.0
        %1130 = vmatpush.msra.mxu0 0.0
        %1131 = vmatpush.msra.mxu0 0.0
        %1132 = vmatpush.msra.mxu0 0.0
        %1133 = vmatpush.msra.mxu0 0.0
        %1134 = vmatpush.msra.mxu0 0.0
        %1135 = vmatpush.msra.mxu0 0.0
        %1136 = vmatpush.msra.mxu0 0.0
        %1137 = vmatpush.msra.mxu0 0.0
        %1138 = vmatpush.msra.mxu0 0.0
        %1139 = vmatpush.msra.mxu0 0.0
        %1140 = vmatpush.msra.mxu0 0.0
        %1141 = vmatpush.msra.mxu0 0.0
        %v1142 = vand.u32 %v1125, 4294901760
        %1143 = vmatpush.msra.mxu0 %v1142
        %v1144 = vand.u32 %v1123, 4294901760
        %v1145 = vsub.f32 %v1123, %v1144
        %v1146 = vand.u32 %v1145, 4294901760
        %v1147 = vsub.f32 %v1145, %v1146
        %v1148 = vand.u32 %v1147, 4294901760
        %1149 = vmatmul.f32.gmra.mxu0 %v1148
        %v1150 = vpop.f32.mrf.mxu0
        %v1151 = vadd.f32 0.0, %v1150
        %1152 = vdwg.mxu0
        %1153 = vmatpush.msra.mxu0 0.0
        %1154 = vmatpush.msra.mxu0 0.0
        %1155 = vmatpush.msra.mxu0 0.0
        %1156 = vmatpush.msra.mxu0 0.0
        %1157 = vmatpush.msra.mxu0 0.0
        %1158 = vmatpush.msra.mxu0 0.0
        %1159 = vmatpush.msra.mxu0 0.0
        %1160 = vmatpush.msra.mxu0 0.0
        %1161 = vmatpush.msra.mxu0 0.0
        %1162 = vmatpush.msra.mxu0 0.0
        %1163 = vmatpush.msra.mxu0 0.0
        %1164 = vmatpush.msra.mxu0 0.0
        %1165 = vmatpush.msra.mxu0 0.0
        %1166 = vmatpush.msra.mxu0 0.0
        %1167 = vmatpush.msra.mxu0 0.0
        %v1168 = vand.u32 %v1125, 4294901760
        %v1169 = vsub.f32 %v1125, %v1168
        %v1170 = vand.u32 %v1169, 4294901760
        %v1171 = vsub.f32 %v1169, %v1170
        %v1172 = vand.u32 %v1171, 4294901760
        %1173 = vmatpush.msra.mxu0 %v1172
        %v1174 = vand.u32 %v1123, 4294901760
        %1175 = vmatmul.f32.gmra.mxu0 %v1174
        %v1176 = vpop.f32.mrf.mxu0
        %v1177 = vadd.f32 %v1151, %v1176
        %1178 = vdwg.mxu0
        %1179 = vmatpush.msra.mxu0 0.0
        %1180 = vmatpush.msra.mxu0 0.0
        %1181 = vmatpush.msra.mxu0 0.0
        %1182 = vmatpush.msra.mxu0 0.0
        %1183 = vmatpush.msra.mxu0 0.0
        %1184 = vmatpush.msra.mxu0 0.0
        %1185 = vmatpush.msra.mxu0 0.0
        %1186 = vmatpush.msra.mxu0 0.0
        %1187 = vmatpush.msra.mxu0 0.0
        %1188 = vmatpush.msra.mxu0 0.0
        %1189 = vmatpush.msra.mxu0 0.0
        %1190 = vmatpush.msra.mxu0 0.0
        %1191 = vmatpush.msra.mxu0 0.0
        %1192 = vmatpush.msra.mxu0 0.0
        %1193 = vmatpush.msra.mxu0 0.0
        %v1194 = vand.u32 %v1125, 4294901760
        %v1195 = vsub.f32 %v1125, %v1194
        %1196 = vmatpush.msra.mxu0 %v1195
        %v1197 = vand.u32 %v1123, 4294901760
        %v1198 = vsub.f32 %v1123, %v1197
        %1199 = vmatmul.f32.gmra.mxu0 %v1198
        %v1200 = vpop.f32.mrf.mxu0
        %v1201 = vadd.f32 %v1177, %v1200
        %1202 = vdwg.mxu0
        %1203 = vmatpush.msra.mxu0 0.0
        %1204 = vmatpush.msra.mxu0 0.0
        %1205 = vmatpush.msra.mxu0 0.0
        %1206 = vmatpush.msra.mxu0 0.0
        %1207 = vmatpush.msra.mxu0 0.0
        %1208 = vmatpush.msra.mxu0 0.0
        %1209 = vmatpush.msra.mxu0 0.0
        %1210 = vmatpush.msra.mxu0 0.0
        %1211 = vmatpush.msra.mxu0 0.0
        %1212 = vmatpush.msra.mxu0 0.0
        %1213 = vmatpush.msra.mxu0 0.0
        %1214 = vmatpush.msra.mxu0 0.0
        %1215 = vmatpush.msra.mxu0 0.0
        %1216 = vmatpush.msra.mxu0 0.0
        %1217 = vmatpush.msra.mxu0 0.0
        %v1218 = vand.u32 %v1125, 4294901760
        %1219 = vmatpush.msra.mxu0 %v1218
        %v1220 = vand.u32 %v1123, 4294901760
        %v1221 = vsub.f32 %v1123, %v1220
        %v1222 = vand.u32 %v1221, 4294901760
        %1223 = vmatmul.f32.gmra.mxu0 %v1222
        %v1224 = vpop.f32.mrf.mxu0
        %v1225 = vadd.f32 %v1201, %v1224
        %1226 = vdwg.mxu0
        %1227 = vmatpush.msra.mxu0 0.0
        %1228 = vmatpush.msra.mxu0 0.0
        %1229 = vmatpush.msra.mxu0 0.0
        %1230 = vmatpush.msra.mxu0 0.0
        %1231 = vmatpush.msra.mxu0 0.0
        %1232 = vmatpush.msra.mxu0 0.0
        %1233 = vmatpush.msra.mxu0 0.0
        %1234 = vmatpush.msra.mxu0 0.0
        %1235 = vmatpush.msra.mxu0 0.0
        %1236 = vmatpush.msra.mxu0 0.0
        %1237 = vmatpush.msra.mxu0 0.0
        %1238 = vmatpush.msra.mxu0 0.0
        %1239 = vmatpush.msra.mxu0 0.0
        %1240 = vmatpush.msra.mxu0 0.0
        %1241 = vmatpush.msra.mxu0 0.0
        %v1242 = vand.u32 %v1125, 4294901760
        %v1243 = vsub.f32 %v1125, %v1242
        %v1244 = vand.u32 %v1243, 4294901760
        %1245 = vmatpush.msra.mxu0 %v1244
        %v1246 = vand.u32 %v1123, 4294901760
        %1247 = vmatmul.f32.gmra.mxu0 %v1246
        %v1248 = vpop.f32.mrf.mxu0
        %v1249 = vadd.f32 %v1225, %v1248
        %1250 = vdwg.mxu0
        %1251 = vmatpush.msra.mxu0 0.0
        %1252 = vmatpush.msra.mxu0 0.0
        %1253 = vmatpush.msra.mxu0 0.0
        %1254 = vmatpush.msra.mxu0 0.0
        %1255 = vmatpush.msra.mxu0 0.0
        %1256 = vmatpush.msra.mxu0 0.0
        %1257 = vmatpush.msra.mxu0 0.0
        %1258 = vmatpush.msra.mxu0 0.0
        %1259 = vmatpush.msra.mxu0 0.0
        %1260 = vmatpush.msra.mxu0 0.0
        %1261 = vmatpush.msra.mxu0 0.0
        %1262 = vmatpush.msra.mxu0 0.0
        %1263 = vmatpush.msra.mxu0 0.0
        %1264 = vmatpush.msra.mxu0 0.0
        %1265 = vmatpush.msra.mxu0 0.0
        %v1266 = vand.u32 %v1125, 4294901760
        %1267 = vmatpush.msra.mxu0 %v1266
        %v1268 = vand.u32 %v1123, 4294901760
        %1269 = vmatmul.f32.gmra.mxu0 %v1268
        %v1270 = vpop.f32.mrf.mxu0
        %v1271 = vadd.f32 %v1249, %v1270
        %1272 = vdwg.mxu0
        %v1273 = vadd.f32 %v1117, %v1271
        %1275 = vset.pattern.permute.xlu0 0
        %1276 = vperm.xlu0 %1275, %v488
        %v1277 = vpop.permute.xlu0 %1276
        %v1279 = vadd.f32 %v1273, %v1277
        %v1280 = vld [vmem:[%s4] sm:$0xff]
        %v1281 = vld [vmem:[%s5] sm:$0xff]
        %vm1282 = vcmask 130048
        %v1283 = vsel %vm1282, %v1279, 0.0
        %1284 = vadd.xlane.f32.xlu0 %v1283
        %v1285 = vpop.xlane.xlu0 %1284
        %v1286 = vrcp.pop 16.0
        %v1287 = vmul.f32 16.0, %v1286
        %v1288 = vsub.f32 1.0, %v1287
        %v1289 = vmul.f32 %v1286, %v1288
        %v1290 = vadd.f32 %v1286, %v1289
        %vm1291 = vweird.f32 %v1286
        %v1292 = vsel %vm1291, %v1286, %v1290
        %v1293 = vmul.f32 %v1285, %v1292
        %v1294 = vsub.f32 %v1279, %v1293
        %v1295 = vmul.f32 %v1294, %v1294
        %v1296 = vsel %vm1282, %v1295, 0.0
        %1297 = vadd.xlane.f32.xlu0 %v1296
        %v1298 = vpop.xlane.xlu0 %1297
        %v1299 = vmul.f32 %v1298, %v1292
        %v1300 = vadd.f32 %v1299, 1e-05
        %v1301 = vrsqrt.pop %v1300
        %v1302 = vmul.f32 %v1301, %v1300
        %v1303 = vmul.f32 %v1302, %v1301
        %v1304 = vmul.f32 0.5, %v1303
        %v1305 = vsub.f32 1.5, %v1304
        %v1306 = vmul.f32 %v1301, %v1305
        %v1307 = vmul.f32 %v1300, %v1306
        %vm1308 = vcmp.eq.f32.partialorder %v1300, inf
        %v1309 = vsel %vm1308, %v1300, %v1307
        %vm1310 = vcmp.eq.f32.partialorder %v1300, 0.0
        %v1311 = vand.u32 %v1300, 2147483648
        %v1312 = vsel %vm1310, %v1311, %v1309
        %v1313 = vrcp.pop %v1312
        %v1314 = vmul.f32 %v1312, %v1313
        %v1315 = vsub.f32 1.0, %v1314
        %v1316 = vmul.f32 %v1313, %v1315
        %v1317 = vadd.f32 %v1313, %v1316
        %vm1318 = vweird.f32 %v1312
        %vm1319 = vweird.f32 %v1313
        %vm1320 = vmor %vm1318, %vm1319
        %v1321 = vsel %vm1320, %v1313, %v1317
        %v1322 = vand.u32 2147483647, %v1312
        %vm1323 = vcmp.eq.f32.partialorder %v1322, 8.507059e+37
        %v1324 = vand.u32 %v1312, 2147483648
        %v1325 = vor.u32 1.1754944e-38, %v1324
        %v1326 = vsel %vm1323, %v1325, %v1321
        %v1327 = vmul.f32 %v1294, %v1326
        %1329 = vset.pattern.permute.xlu0 0
        %1330 = vperm.xlu0 %1329, %v1280
        %v1331 = vpop.permute.xlu0 %1330
        %v1333 = vmul.f32 %v1327, %v1331
        %1335 = vset.pattern.permute.xlu0 0
        %1336 = vperm.xlu0 %1335, %v1281
        %v1337 = vpop.permute.xlu0 %1336
        %v1339 = vadd.f32 %v1333, %v1337
        %v1340 = vmax.f32 %v1339, 0.0
        %v1341 = vand.u32 2147483647, %v1339
        %v1342 = vsub.f32 0.0, %v1341
        %v1343 = vmul.f32 %v1342, 1.442695
        %v1344 = vpow.pop %v1343
        %v1345 = vadd.f32 %v1344, 1.0
        %v1346 = vlog2.pop %v1345
        %v1347 = vmul.f32 %v1346, 0.6931472
        %v1348 = vadd.f32 %v1340, %v1347
        %v1349 = vtanh.pop %v1348
        %v1350 = vmul.f32 %v1339, %v1349
        %1352 = vset.pattern.permute.xlu0 0
        %1353 = vperm.xlu0 %1352, %v487
        %v1354 = vpop.permute.xlu0 %1353
        %v1356 = vadd.f32 %v1350, %v1354
        %v1357 = vld [vmem:[%s7] sm:$0xff]
        %1359 = vrot.lane.b32.xlu0 %v1356, 2
        %v1360 = vpop.permute.xlu0 %1359
        %vm1362 = vcmask 146448
        %1363 = vst.msk [vmem:[#allocation2] sm:$0xff] %vm1362, %v1360
        %v1364 = vld [vmem:[#allocation2] sm:$0xff]
        %v1365 = vld [vmem:[%s6] sm:$0xff]
        %s1366 = scalar_lea.vmem %s6, 8
        %v1367 = vld [vmem:[%s1366] sm:$0xff]
        %1369 = vrot.lane.b32.xlu0 %v1364, 127
        %v1370 = vpop.permute.xlu0 %1369
        %vm1372 = vcmask 64512
        %v1374 = vsel %vm1372, %v1367, 0
        %1376 = vmatpush.msra.mxu0 0.0
        %1377 = vmatpush.msra.mxu0 0.0
        %1378 = vmatpush.msra.mxu0 0.0
        %1379 = vmatpush.msra.mxu0 0.0
        %1380 = vmatpush.msra.mxu0 0.0
        %1381 = vmatpush.msra.mxu0 0.0
        %1382 = vmatpush.msra.mxu0 0.0
        %1383 = vmatpush.msra.mxu0 0.0
        %1384 = vmatpush.msra.mxu0 0.0
        %1385 = vmatpush.msra.mxu0 0.0
        %1386 = vmatpush.msra.mxu0 0.0
        %1387 = vmatpush.msra.mxu0 0.0
        %1388 = vmatpush.msra.mxu0 0.0
        %1389 = vmatpush.msra.mxu0 0.0
        %1390 = vmatpush.msra.mxu0 0.0
        %v1391 = vand.u32 %v1370, 4294901760
        %1392 = vmatpush.msra.mxu0 %v1391
        %v1393 = vand.u32 %v1374, 4294901760
        %v1394 = vsub.f32 %v1374, %v1393
        %v1395 = vand.u32 %v1394, 4294901760
        %v1396 = vsub.f32 %v1394, %v1395
        %v1397 = vand.u32 %v1396, 4294901760
        %1398 = vmatmul.f32.gmra.mxu0 %v1397
        %v1399 = vpop.f32.mrf.mxu0
        %v1400 = vadd.f32 0.0, %v1399
        %1401 = vdwg.mxu0
        %1402 = vmatpush.msra.mxu0 0.0
        %1403 = vmatpush.msra.mxu0 0.0
        %1404 = vmatpush.msra.mxu0 0.0
        %1405 = vmatpush.msra.mxu0 0.0
        %1406 = vmatpush.msra.mxu0 0.0
        %1407 = vmatpush.msra.mxu0 0.0
        %1408 = vmatpush.msra.mxu0 0.0
        %1409 = vmatpush.msra.mxu0 0.0
        %1410 = vmatpush.msra.mxu0 0.0
        %1411 = vmatpush.msra.mxu0 0.0
        %1412 = vmatpush.msra.mxu0 0.0
        %1413 = vmatpush.msra.mxu0 0.0
        %1414 = vmatpush.msra.mxu0 0.0
        %1415 = vmatpush.msra.mxu0 0.0
        %1416 = vmatpush.msra.mxu0 0.0
        %v1417 = vand.u32 %v1370, 4294901760
        %v1418 = vsub.f32 %v1370, %v1417
        %v1419 = vand.u32 %v1418, 4294901760
        %v1420 = vsub.f32 %v1418, %v1419
        %v1421 = vand.u32 %v1420, 4294901760
        %1422 = vmatpush.msra.mxu0 %v1421
        %v1423 = vand.u32 %v1374, 4294901760
        %1424 = vmatmul.f32.gmra.mxu0 %v1423
        %v1425 = vpop.f32.mrf.mxu0
        %v1426 = vadd.f32 %v1400, %v1425
        %1427 = vdwg.mxu0
        %1428 = vmatpush.msra.mxu0 0.0
        %1429 = vmatpush.msra.mxu0 0.0
        %1430 = vmatpush.msra.mxu0 0.0
        %1431 = vmatpush.msra.mxu0 0.0
        %1432 = vmatpush.msra.mxu0 0.0
        %1433 = vmatpush.msra.mxu0 0.0
        %1434 = vmatpush.msra.mxu0 0.0
        %1435 = vmatpush.msra.mxu0 0.0
        %1436 = vmatpush.msra.mxu0 0.0
        %1437 = vmatpush.msra.mxu0 0.0
        %1438 = vmatpush.msra.mxu0 0.0
        %1439 = vmatpush.msra.mxu0 0.0
        %1440 = vmatpush.msra.mxu0 0.0
        %1441 = vmatpush.msra.mxu0 0.0
        %1442 = vmatpush.msra.mxu0 0.0
        %v1443 = vand.u32 %v1370, 4294901760
        %v1444 = vsub.f32 %v1370, %v1443
        %1445 = vmatpush.msra.mxu0 %v1444
        %v1446 = vand.u32 %v1374, 4294901760
        %v1447 = vsub.f32 %v1374, %v1446
        %1448 = vmatmul.f32.gmra.mxu0 %v1447
        %v1449 = vpop.f32.mrf.mxu0
        %v1450 = vadd.f32 %v1426, %v1449
        %1451 = vdwg.mxu0
        %1452 = vmatpush.msra.mxu0 0.0
        %1453 = vmatpush.msra.mxu0 0.0
        %1454 = vmatpush.msra.mxu0 0.0
        %1455 = vmatpush.msra.mxu0 0.0
        %1456 = vmatpush.msra.mxu0 0.0
        %1457 = vmatpush.msra.mxu0 0.0
        %1458 = vmatpush.msra.mxu0 0.0
        %1459 = vmatpush.msra.mxu0 0.0
        %1460 = vmatpush.msra.mxu0 0.0
        %1461 = vmatpush.msra.mxu0 0.0
        %1462 = vmatpush.msra.mxu0 0.0
        %1463 = vmatpush.msra.mxu0 0.0
        %1464 = vmatpush.msra.mxu0 0.0
        %1465 = vmatpush.msra.mxu0 0.0
        %1466 = vmatpush.msra.mxu0 0.0
        %v1467 = vand.u32 %v1370, 4294901760
        %1468 = vmatpush.msra.mxu0 %v1467
        %v1469 = vand.u32 %v1374, 4294901760
        %v1470 = vsub.f32 %v1374, %v1469
        %v1471 = vand.u32 %v1470, 4294901760
        %1472 = vmatmul.f32.gmra.mxu0 %v1471
        %v1473 = vpop.f32.mrf.mxu0
        %v1474 = vadd.f32 %v1450, %v1473
        %1475 = vdwg.mxu0
        %1476 = vmatpush.msra.mxu0 0.0
        %1477 = vmatpush.msra.mxu0 0.0
        %1478 = vmatpush.msra.mxu0 0.0
        %1479 = vmatpush.msra.mxu0 0.0
        %1480 = vmatpush.msra.mxu0 0.0
        %1481 = vmatpush.msra.mxu0 0.0
        %1482 = vmatpush.msra.mxu0 0.0
        %1483 = vmatpush.msra.mxu0 0.0
        %1484 = vmatpush.msra.mxu0 0.0
        %1485 = vmatpush.msra.mxu0 0.0
        %1486 = vmatpush.msra.mxu0 0.0
        %1487 = vmatpush.msra.mxu0 0.0
        %1488 = vmatpush.msra.mxu0 0.0
        %1489 = vmatpush.msra.mxu0 0.0
        %1490 = vmatpush.msra.mxu0 0.0
        %v1491 = vand.u32 %v1370, 4294901760
        %v1492 = vsub.f32 %v1370, %v1491
        %v1493 = vand.u32 %v1492, 4294901760
        %1494 = vmatpush.msra.mxu0 %v1493
        %v1495 = vand.u32 %v1374, 4294901760
        %1496 = vmatmul.f32.gmra.mxu0 %v1495
        %v1497 = vpop.f32.mrf.mxu0
        %v1498 = vadd.f32 %v1474, %v1497
        %1499 = vdwg.mxu0
        %1500 = vmatpush.msra.mxu0 0.0
        %1501 = vmatpush.msra.mxu0 0.0
        %1502 = vmatpush.msra.mxu0 0.0
        %1503 = vmatpush.msra.mxu0 0.0
        %1504 = vmatpush.msra.mxu0 0.0
        %1505 = vmatpush.msra.mxu0 0.0
        %1506 = vmatpush.msra.mxu0 0.0
        %1507 = vmatpush.msra.mxu0 0.0
        %1508 = vmatpush.msra.mxu0 0.0
        %1509 = vmatpush.msra.mxu0 0.0
        %1510 = vmatpush.msra.mxu0 0.0
        %1511 = vmatpush.msra.mxu0 0.0
        %1512 = vmatpush.msra.mxu0 0.0
        %1513 = vmatpush.msra.mxu0 0.0
        %1514 = vmatpush.msra.mxu0 0.0
        %v1515 = vand.u32 %v1370, 4294901760
        %1516 = vmatpush.msra.mxu0 %v1515
        %v1517 = vand.u32 %v1374, 4294901760
        %1518 = vmatmul.f32.gmra.mxu0 %v1517
        %v1519 = vpop.f32.mrf.mxu0
        %v1520 = vadd.f32 %v1498, %v1519
        %1521 = vdwg.mxu0
        %v1523 = vsel %vm1372, %v1365, 0
        %1525 = vmatpush.msra.mxu0 0.0
        %1526 = vmatpush.msra.mxu0 0.0
        %1527 = vmatpush.msra.mxu0 0.0
        %1528 = vmatpush.msra.mxu0 0.0
        %1529 = vmatpush.msra.mxu0 0.0
        %1530 = vmatpush.msra.mxu0 0.0
        %1531 = vmatpush.msra.mxu0 0.0
        %1532 = vmatpush.msra.mxu0 0.0
        %1533 = vmatpush.msra.mxu0 0.0
        %1534 = vmatpush.msra.mxu0 0.0
        %1535 = vmatpush.msra.mxu0 0.0
        %1536 = vmatpush.msra.mxu0 0.0
        %1537 = vmatpush.msra.mxu0 0.0
        %1538 = vmatpush.msra.mxu0 0.0
        %1539 = vmatpush.msra.mxu0 0.0
        %v1540 = vand.u32 %v1364, 4294901760
        %1541 = vmatpush.msra.mxu0 %v1540
        %v1542 = vand.u32 %v1523, 4294901760
        %v1543 = vsub.f32 %v1523, %v1542
        %v1544 = vand.u32 %v1543, 4294901760
        %v1545 = vsub.f32 %v1543, %v1544
        %v1546 = vand.u32 %v1545, 4294901760
        %1547 = vmatmul.f32.gmra.mxu0 %v1546
        %v1548 = vpop.f32.mrf.mxu0
        %v1549 = vadd.f32 %v1520, %v1548
        %1550 = vdwg.mxu0
        %1551 = vmatpush.msra.mxu0 0.0
        %1552 = vmatpush.msra.mxu0 0.0
        %1553 = vmatpush.msra.mxu0 0.0
        %1554 = vmatpush.msra.mxu0 0.0
        %1555 = vmatpush.msra.mxu0 0.0
        %1556 = vmatpush.msra.mxu0 0.0
        %1557 = vmatpush.msra.mxu0 0.0
        %1558 = vmatpush.msra.mxu0 0.0
        %1559 = vmatpush.msra.mxu0 0.0
        %1560 = vmatpush.msra.mxu0 0.0
        %1561 = vmatpush.msra.mxu0 0.0
        %1562 = vmatpush.msra.mxu0 0.0
        %1563 = vmatpush.msra.mxu0 0.0
        %1564 = vmatpush.msra.mxu0 0.0
        %1565 = vmatpush.msra.mxu0 0.0
        %v1566 = vand.u32 %v1364, 4294901760
        %v1567 = vsub.f32 %v1364, %v1566
        %v1568 = vand.u32 %v1567, 4294901760
        %v1569 = vsub.f32 %v1567, %v1568
        %v1570 = vand.u32 %v1569, 4294901760
        %1571 = vmatpush.msra.mxu0 %v1570
        %v1572 = vand.u32 %v1523, 4294901760
        %1573 = vmatmul.f32.gmra.mxu0 %v1572
        %v1574 = vpop.f32.mrf.mxu0
        %v1575 = vadd.f32 %v1549, %v1574
        %1576 = vdwg.mxu0
        %1577 = vmatpush.msra.mxu0 0.0
        %1578 = vmatpush.msra.mxu0 0.0
        %1579 = vmatpush.msra.mxu0 0.0
        %1580 = vmatpush.msra.mxu0 0.0
        %1581 = vmatpush.msra.mxu0 0.0
        %1582 = vmatpush.msra.mxu0 0.0
        %1583 = vmatpush.msra.mxu0 0.0
        %1584 = vmatpush.msra.mxu0 0.0
        %1585 = vmatpush.msra.mxu0 0.0
        %1586 = vmatpush.msra.mxu0 0.0
        %1587 = vmatpush.msra.mxu0 0.0
        %1588 = vmatpush.msra.mxu0 0.0
        %1589 = vmatpush.msra.mxu0 0.0
        %1590 = vmatpush.msra.mxu0 0.0
        %1591 = vmatpush.msra.mxu0 0.0
        %v1592 = vand.u32 %v1364, 4294901760
        %v1593 = vsub.f32 %v1364, %v1592
        %1594 = vmatpush.msra.mxu0 %v1593
        %v1595 = vand.u32 %v1523, 4294901760
        %v1596 = vsub.f32 %v1523, %v1595
        %1597 = vmatmul.f32.gmra.mxu0 %v1596
        %v1598 = vpop.f32.mrf.mxu0
        %v1599 = vadd.f32 %v1575, %v1598
        %1600 = vdwg.mxu0
        %1601 = vmatpush.msra.mxu0 0.0
        %1602 = vmatpush.msra.mxu0 0.0
        %1603 = vmatpush.msra.mxu0 0.0
        %1604 = vmatpush.msra.mxu0 0.0
        %1605 = vmatpush.msra.mxu0 0.0
        %1606 = vmatpush.msra.mxu0 0.0
        %1607 = vmatpush.msra.mxu0 0.0
        %1608 = vmatpush.msra.mxu0 0.0
        %1609 = vmatpush.msra.mxu0 0.0
        %1610 = vmatpush.msra.mxu0 0.0
        %1611 = vmatpush.msra.mxu0 0.0
        %1612 = vmatpush.msra.mxu0 0.0
        %1613 = vmatpush.msra.mxu0 0.0
        %1614 = vmatpush.msra.mxu0 0.0
        %1615 = vmatpush.msra.mxu0 0.0
        %v1616 = vand.u32 %v1364, 4294901760
        %1617 = vmatpush.msra.mxu0 %v1616
        %v1618 = vand.u32 %v1523, 4294901760
        %v1619 = vsub.f32 %v1523, %v1618
        %v1620 = vand.u32 %v1619, 4294901760
        %1621 = vmatmul.f32.gmra.mxu0 %v1620
        %v1622 = vpop.f32.mrf.mxu0
        %v1623 = vadd.f32 %v1599, %v1622
        %1624 = vdwg.mxu0
        %1625 = vmatpush.msra.mxu0 0.0
        %1626 = vmatpush.msra.mxu0 0.0
        %1627 = vmatpush.msra.mxu0 0.0
        %1628 = vmatpush.msra.mxu0 0.0
        %1629 = vmatpush.msra.mxu0 0.0
        %1630 = vmatpush.msra.mxu0 0.0
        %1631 = vmatpush.msra.mxu0 0.0
        %1632 = vmatpush.msra.mxu0 0.0
        %1633 = vmatpush.msra.mxu0 0.0
        %1634 = vmatpush.msra.mxu0 0.0
        %1635 = vmatpush.msra.mxu0 0.0
        %1636 = vmatpush.msra.mxu0 0.0
        %1637 = vmatpush.msra.mxu0 0.0
        %1638 = vmatpush.msra.mxu0 0.0
        %1639 = vmatpush.msra.mxu0 0.0
        %v1640 = vand.u32 %v1364, 4294901760
        %v1641 = vsub.f32 %v1364, %v1640
        %v1642 = vand.u32 %v1641, 4294901760
        %1643 = vmatpush.msra.mxu0 %v1642
        %v1644 = vand.u32 %v1523, 4294901760
        %1645 = vmatmul.f32.gmra.mxu0 %v1644
        %v1646 = vpop.f32.mrf.mxu0
        %v1647 = vadd.f32 %v1623, %v1646
        %1648 = vdwg.mxu0
        %1649 = vmatpush.msra.mxu0 0.0
        %1650 = vmatpush.msra.mxu0 0.0
        %1651 = vmatpush.msra.mxu0 0.0
        %1652 = vmatpush.msra.mxu0 0.0
        %1653 = vmatpush.msra.mxu0 0.0
        %1654 = vmatpush.msra.mxu0 0.0
        %1655 = vmatpush.msra.mxu0 0.0
        %1656 = vmatpush.msra.mxu0 0.0
        %1657 = vmatpush.msra.mxu0 0.0
        %1658 = vmatpush.msra.mxu0 0.0
        %1659 = vmatpush.msra.mxu0 0.0
        %1660 = vmatpush.msra.mxu0 0.0
        %1661 = vmatpush.msra.mxu0 0.0
        %1662 = vmatpush.msra.mxu0 0.0
        %1663 = vmatpush.msra.mxu0 0.0
        %v1664 = vand.u32 %v1364, 4294901760
        %1665 = vmatpush.msra.mxu0 %v1664
        %v1666 = vand.u32 %v1523, 4294901760
        %1667 = vmatmul.f32.gmra.mxu0 %v1666
        %v1668 = vpop.f32.mrf.mxu0
        %v1669 = vadd.f32 %v1647, %v1668
        %1670 = vdwg.mxu0
        %s1671 = scalar_lea.vmem %s6, 16
        %v1672 = vld [vmem:[%s1671] sm:$0xff]
        %1673 = vrot.lane.b32.xlu0 %v1364, 126
        %v1674 = vpop.permute.xlu0 %1673
        %v1677 = vsel %vm1372, %v1672, 0
        %1679 = vmatpush.msra.mxu0 0.0
        %1680 = vmatpush.msra.mxu0 0.0
        %1681 = vmatpush.msra.mxu0 0.0
        %1682 = vmatpush.msra.mxu0 0.0
        %1683 = vmatpush.msra.mxu0 0.0
        %1684 = vmatpush.msra.mxu0 0.0
        %1685 = vmatpush.msra.mxu0 0.0
        %1686 = vmatpush.msra.mxu0 0.0
        %1687 = vmatpush.msra.mxu0 0.0
        %1688 = vmatpush.msra.mxu0 0.0
        %1689 = vmatpush.msra.mxu0 0.0
        %1690 = vmatpush.msra.mxu0 0.0
        %1691 = vmatpush.msra.mxu0 0.0
        %1692 = vmatpush.msra.mxu0 0.0
        %1693 = vmatpush.msra.mxu0 0.0
        %v1694 = vand.u32 %v1674, 4294901760
        %1695 = vmatpush.msra.mxu0 %v1694
        %v1696 = vand.u32 %v1677, 4294901760
        %v1697 = vsub.f32 %v1677, %v1696
        %v1698 = vand.u32 %v1697, 4294901760
        %v1699 = vsub.f32 %v1697, %v1698
        %v1700 = vand.u32 %v1699, 4294901760
        %1701 = vmatmul.f32.gmra.mxu0 %v1700
        %v1702 = vpop.f32.mrf.mxu0
        %v1703 = vadd.f32 0.0, %v1702
        %1704 = vdwg.mxu0
        %1705 = vmatpush.msra.mxu0 0.0
        %1706 = vmatpush.msra.mxu0 0.0
        %1707 = vmatpush.msra.mxu0 0.0
        %1708 = vmatpush.msra.mxu0 0.0
        %1709 = vmatpush.msra.mxu0 0.0
        %1710 = vmatpush.msra.mxu0 0.0
        %1711 = vmatpush.msra.mxu0 0.0
        %1712 = vmatpush.msra.mxu0 0.0
        %1713 = vmatpush.msra.mxu0 0.0
        %1714 = vmatpush.msra.mxu0 0.0
        %1715 = vmatpush.msra.mxu0 0.0
        %1716 = vmatpush.msra.mxu0 0.0
        %1717 = vmatpush.msra.mxu0 0.0
        %1718 = vmatpush.msra.mxu0 0.0
        %1719 = vmatpush.msra.mxu0 0.0
        %v1720 = vand.u32 %v1674, 4294901760
        %v1721 = vsub.f32 %v1674, %v1720
        %v1722 = vand.u32 %v1721, 4294901760
        %v1723 = vsub.f32 %v1721, %v1722
        %v1724 = vand.u32 %v1723, 4294901760
        %1725 = vmatpush.msra.mxu0 %v1724
        %v1726 = vand.u32 %v1677, 4294901760
        %1727 = vmatmul.f32.gmra.mxu0 %v1726
        %v1728 = vpop.f32.mrf.mxu0
        %v1729 = vadd.f32 %v1703, %v1728
        %1730 = vdwg.mxu0
        %1731 = vmatpush.msra.mxu0 0.0
        %1732 = vmatpush.msra.mxu0 0.0
        %1733 = vmatpush.msra.mxu0 0.0
        %1734 = vmatpush.msra.mxu0 0.0
        %1735 = vmatpush.msra.mxu0 0.0
        %1736 = vmatpush.msra.mxu0 0.0
        %1737 = vmatpush.msra.mxu0 0.0
        %1738 = vmatpush.msra.mxu0 0.0
        %1739 = vmatpush.msra.mxu0 0.0
        %1740 = vmatpush.msra.mxu0 0.0
        %1741 = vmatpush.msra.mxu0 0.0
        %1742 = vmatpush.msra.mxu0 0.0
        %1743 = vmatpush.msra.mxu0 0.0
        %1744 = vmatpush.msra.mxu0 0.0
        %1745 = vmatpush.msra.mxu0 0.0
        %v1746 = vand.u32 %v1674, 4294901760
        %v1747 = vsub.f32 %v1674, %v1746
        %1748 = vmatpush.msra.mxu0 %v1747
        %v1749 = vand.u32 %v1677, 4294901760
        %v1750 = vsub.f32 %v1677, %v1749
        %1751 = vmatmul.f32.gmra.mxu0 %v1750
        %v1752 = vpop.f32.mrf.mxu0
        %v1753 = vadd.f32 %v1729, %v1752
        %1754 = vdwg.mxu0
        %1755 = vmatpush.msra.mxu0 0.0
        %1756 = vmatpush.msra.mxu0 0.0
        %1757 = vmatpush.msra.mxu0 0.0
        %1758 = vmatpush.msra.mxu0 0.0
        %1759 = vmatpush.msra.mxu0 0.0
        %1760 = vmatpush.msra.mxu0 0.0
        %1761 = vmatpush.msra.mxu0 0.0
        %1762 = vmatpush.msra.mxu0 0.0
        %1763 = vmatpush.msra.mxu0 0.0
        %1764 = vmatpush.msra.mxu0 0.0
        %1765 = vmatpush.msra.mxu0 0.0
        %1766 = vmatpush.msra.mxu0 0.0
        %1767 = vmatpush.msra.mxu0 0.0
        %1768 = vmatpush.msra.mxu0 0.0
        %1769 = vmatpush.msra.mxu0 0.0
        %v1770 = vand.u32 %v1674, 4294901760
        %1771 = vmatpush.msra.mxu0 %v1770
        %v1772 = vand.u32 %v1677, 4294901760
        %v1773 = vsub.f32 %v1677, %v1772
        %v1774 = vand.u32 %v1773, 4294901760
        %1775 = vmatmul.f32.gmra.mxu0 %v1774
        %v1776 = vpop.f32.mrf.mxu0
        %v1777 = vadd.f32 %v1753, %v1776
        %1778 = vdwg.mxu0
        %1779 = vmatpush.msra.mxu0 0.0
        %1780 = vmatpush.msra.mxu0 0.0
        %1781 = vmatpush.msra.mxu0 0.0
        %1782 = vmatpush.msra.mxu0 0.0
        %1783 = vmatpush.msra.mxu0 0.0
        %1784 = vmatpush.msra.mxu0 0.0
        %1785 = vmatpush.msra.mxu0 0.0
        %1786 = vmatpush.msra.mxu0 0.0
        %1787 = vmatpush.msra.mxu0 0.0
        %1788 = vmatpush.msra.mxu0 0.0
        %1789 = vmatpush.msra.mxu0 0.0
        %1790 = vmatpush.msra.mxu0 0.0
        %1791 = vmatpush.msra.mxu0 0.0
        %1792 = vmatpush.msra.mxu0 0.0
        %1793 = vmatpush.msra.mxu0 0.0
        %v1794 = vand.u32 %v1674, 4294901760
        %v1795 = vsub.f32 %v1674, %v1794
        %v1796 = vand.u32 %v1795, 4294901760
        %1797 = vmatpush.msra.mxu0 %v1796
        %v1798 = vand.u32 %v1677, 4294901760
        %1799 = vmatmul.f32.gmra.mxu0 %v1798
        %v1800 = vpop.f32.mrf.mxu0
        %v1801 = vadd.f32 %v1777, %v1800
        %1802 = vdwg.mxu0
        %1803 = vmatpush.msra.mxu0 0.0
        %1804 = vmatpush.msra.mxu0 0.0
        %1805 = vmatpush.msra.mxu0 0.0
        %1806 = vmatpush.msra.mxu0 0.0
        %1807 = vmatpush.msra.mxu0 0.0
        %1808 = vmatpush.msra.mxu0 0.0
        %1809 = vmatpush.msra.mxu0 0.0
        %1810 = vmatpush.msra.mxu0 0.0
        %1811 = vmatpush.msra.mxu0 0.0
        %1812 = vmatpush.msra.mxu0 0.0
        %1813 = vmatpush.msra.mxu0 0.0
        %1814 = vmatpush.msra.mxu0 0.0
        %1815 = vmatpush.msra.mxu0 0.0
        %1816 = vmatpush.msra.mxu0 0.0
        %1817 = vmatpush.msra.mxu0 0.0
        %v1818 = vand.u32 %v1674, 4294901760
        %1819 = vmatpush.msra.mxu0 %v1818
        %v1820 = vand.u32 %v1677, 4294901760
        %1821 = vmatmul.f32.gmra.mxu0 %v1820
        %v1822 = vpop.f32.mrf.mxu0
        %v1823 = vadd.f32 %v1801, %v1822
        %1824 = vdwg.mxu0
        %v1825 = vadd.f32 %v1669, %v1823
        %s1826 = scalar_lea.vmem %s6, 24
        %v1827 = vld [vmem:[%s1826] sm:$0xff]
        %1828 = vrot.lane.b32.xlu0 %v1364, 125
        %v1829 = vpop.permute.xlu0 %1828
        %v1832 = vsel %vm1372, %v1827, 0
        %1834 = vmatpush.msra.mxu0 0.0
        %1835 = vmatpush.msra.mxu0 0.0
        %1836 = vmatpush.msra.mxu0 0.0
        %1837 = vmatpush.msra.mxu0 0.0
        %1838 = vmatpush.msra.mxu0 0.0
        %1839 = vmatpush.msra.mxu0 0.0
        %1840 = vmatpush.msra.mxu0 0.0
        %1841 = vmatpush.msra.mxu0 0.0
        %1842 = vmatpush.msra.mxu0 0.0
        %1843 = vmatpush.msra.mxu0 0.0
        %1844 = vmatpush.msra.mxu0 0.0
        %1845 = vmatpush.msra.mxu0 0.0
        %1846 = vmatpush.msra.mxu0 0.0
        %1847 = vmatpush.msra.mxu0 0.0
        %1848 = vmatpush.msra.mxu0 0.0
        %v1849 = vand.u32 %v1829, 4294901760
        %1850 = vmatpush.msra.mxu0 %v1849
        %v1851 = vand.u32 %v1832, 4294901760
        %v1852 = vsub.f32 %v1832, %v1851
        %v1853 = vand.u32 %v1852, 4294901760
        %v1854 = vsub.f32 %v1852, %v1853
        %v1855 = vand.u32 %v1854, 4294901760
        %1856 = vmatmul.f32.gmra.mxu0 %v1855
        %v1857 = vpop.f32.mrf.mxu0
        %v1858 = vadd.f32 0.0, %v1857
        %1859 = vdwg.mxu0
        %1860 = vmatpush.msra.mxu0 0.0
        %1861 = vmatpush.msra.mxu0 0.0
        %1862 = vmatpush.msra.mxu0 0.0
        %1863 = vmatpush.msra.mxu0 0.0
        %1864 = vmatpush.msra.mxu0 0.0
        %1865 = vmatpush.msra.mxu0 0.0
        %1866 = vmatpush.msra.mxu0 0.0
        %1867 = vmatpush.msra.mxu0 0.0
        %1868 = vmatpush.msra.mxu0 0.0
        %1869 = vmatpush.msra.mxu0 0.0
        %1870 = vmatpush.msra.mxu0 0.0
        %1871 = vmatpush.msra.mxu0 0.0
        %1872 = vmatpush.msra.mxu0 0.0
        %1873 = vmatpush.msra.mxu0 0.0
        %1874 = vmatpush.msra.mxu0 0.0
        %v1875 = vand.u32 %v1829, 4294901760
        %v1876 = vsub.f32 %v1829, %v1875
        %v1877 = vand.u32 %v1876, 4294901760
        %v1878 = vsub.f32 %v1876, %v1877
        %v1879 = vand.u32 %v1878, 4294901760
        %1880 = vmatpush.msra.mxu0 %v1879
        %v1881 = vand.u32 %v1832, 4294901760
        %1882 = vmatmul.f32.gmra.mxu0 %v1881
        %v1883 = vpop.f32.mrf.mxu0
        %v1884 = vadd.f32 %v1858, %v1883
        %1885 = vdwg.mxu0
        %1886 = vmatpush.msra.mxu0 0.0
        %1887 = vmatpush.msra.mxu0 0.0
        %1888 = vmatpush.msra.mxu0 0.0
        %1889 = vmatpush.msra.mxu0 0.0
        %1890 = vmatpush.msra.mxu0 0.0
        %1891 = vmatpush.msra.mxu0 0.0
        %1892 = vmatpush.msra.mxu0 0.0
        %1893 = vmatpush.msra.mxu0 0.0
        %1894 = vmatpush.msra.mxu0 0.0
        %1895 = vmatpush.msra.mxu0 0.0
        %1896 = vmatpush.msra.mxu0 0.0
        %1897 = vmatpush.msra.mxu0 0.0
        %1898 = vmatpush.msra.mxu0 0.0
        %1899 = vmatpush.msra.mxu0 0.0
        %1900 = vmatpush.msra.mxu0 0.0
        %v1901 = vand.u32 %v1829, 4294901760
        %v1902 = vsub.f32 %v1829, %v1901
        %1903 = vmatpush.msra.mxu0 %v1902
        %v1904 = vand.u32 %v1832, 4294901760
        %v1905 = vsub.f32 %v1832, %v1904
        %1906 = vmatmul.f32.gmra.mxu0 %v1905
        %v1907 = vpop.f32.mrf.mxu0
        %v1908 = vadd.f32 %v1884, %v1907
        %1909 = vdwg.mxu0
        %1910 = vmatpush.msra.mxu0 0.0
        %1911 = vmatpush.msra.mxu0 0.0
        %1912 = vmatpush.msra.mxu0 0.0
        %1913 = vmatpush.msra.mxu0 0.0
        %1914 = vmatpush.msra.mxu0 0.0
        %1915 = vmatpush.msra.mxu0 0.0
        %1916 = vmatpush.msra.mxu0 0.0
        %1917 = vmatpush.msra.mxu0 0.0
        %1918 = vmatpush.msra.mxu0 0.0
        %1919 = vmatpush.msra.mxu0 0.0
        %1920 = vmatpush.msra.mxu0 0.0
        %1921 = vmatpush.msra.mxu0 0.0
        %1922 = vmatpush.msra.mxu0 0.0
        %1923 = vmatpush.msra.mxu0 0.0
        %1924 = vmatpush.msra.mxu0 0.0
        %v1925 = vand.u32 %v1829, 4294901760
        %1926 = vmatpush.msra.mxu0 %v1925
        %v1927 = vand.u32 %v1832, 4294901760
        %v1928 = vsub.f32 %v1832, %v1927
        %v1929 = vand.u32 %v1928, 4294901760
        %1930 = vmatmul.f32.gmra.mxu0 %v1929
        %v1931 = vpop.f32.mrf.mxu0
        %v1932 = vadd.f32 %v1908, %v1931
        %1933 = vdwg.mxu0
        %1934 = vmatpush.msra.mxu0 0.0
        %1935 = vmatpush.msra.mxu0 0.0
        %1936 = vmatpush.msra.mxu0 0.0
        %1937 = vmatpush.msra.mxu0 0.0
        %1938 = vmatpush.msra.mxu0 0.0
        %1939 = vmatpush.msra.mxu0 0.0
        %1940 = vmatpush.msra.mxu0 0.0
        %1941 = vmatpush.msra.mxu0 0.0
        %1942 = vmatpush.msra.mxu0 0.0
        %1943 = vmatpush.msra.mxu0 0.0
        %1944 = vmatpush.msra.mxu0 0.0
        %1945 = vmatpush.msra.mxu0 0.0
        %1946 = vmatpush.msra.mxu0 0.0
        %1947 = vmatpush.msra.mxu0 0.0
        %1948 = vmatpush.msra.mxu0 0.0
        %v1949 = vand.u32 %v1829, 4294901760
        %v1950 = vsub.f32 %v1829, %v1949
        %v1951 = vand.u32 %v1950, 4294901760
        %1952 = vmatpush.msra.mxu0 %v1951
        %v1953 = vand.u32 %v1832, 4294901760
        %1954 = vmatmul.f32.gmra.mxu0 %v1953
        %v1955 = vpop.f32.mrf.mxu0
        %v1956 = vadd.f32 %v1932, %v1955
        %1957 = vdwg.mxu0
        %1958 = vmatpush.msra.mxu0 0.0
        %1959 = vmatpush.msra.mxu0 0.0
        %1960 = vmatpush.msra.mxu0 0.0
        %1961 = vmatpush.msra.mxu0 0.0
        %1962 = vmatpush.msra.mxu0 0.0
        %1963 = vmatpush.msra.mxu0 0.0
        %1964 = vmatpush.msra.mxu0 0.0
        %1965 = vmatpush.msra.mxu0 0.0
        %1966 = vmatpush.msra.mxu0 0.0
        %1967 = vmatpush.msra.mxu0 0.0
        %1968 = vmatpush.msra.mxu0 0.0
        %1969 = vmatpush.msra.mxu0 0.0
        %1970 = vmatpush.msra.mxu0 0.0
        %1971 = vmatpush.msra.mxu0 0.0
        %1972 = vmatpush.msra.mxu0 0.0
        %v1973 = vand.u32 %v1829, 4294901760
        %1974 = vmatpush.msra.mxu0 %v1973
        %v1975 = vand.u32 %v1832, 4294901760
        %1976 = vmatmul.f32.gmra.mxu0 %v1975
        %v1977 = vpop.f32.mrf.mxu0
        %v1978 = vadd.f32 %v1956, %v1977
        %1979 = vdwg.mxu0
        %v1980 = vadd.f32 %v1825, %v1978
        %s1981 = scalar_lea.vmem %s6, 32
        %v1982 = vld [vmem:[%s1981] sm:$0xff]
        %1983 = vrot.lane.b32.xlu0 %v1364, 124
        %v1984 = vpop.permute.xlu0 %1983
        %v1987 = vsel %vm1372, %v1982, 0
        %1989 = vmatpush.msra.mxu0 0.0
        %1990 = vmatpush.msra.mxu0 0.0
        %1991 = vmatpush.msra.mxu0 0.0
        %1992 = vmatpush.msra.mxu0 0.0
        %1993 = vmatpush.msra.mxu0 0.0
        %1994 = vmatpush.msra.mxu0 0.0
        %1995 = vmatpush.msra.mxu0 0.0
        %1996 = vmatpush.msra.mxu0 0.0
        %1997 = vmatpush.msra.mxu0 0.0
        %1998 = vmatpush.msra.mxu0 0.0
        %1999 = vmatpush.msra.mxu0 0.0
        %2000 = vmatpush.msra.mxu0 0.0
        %2001 = vmatpush.msra.mxu0 0.0
        %2002 = vmatpush.msra.mxu0 0.0
        %2003 = vmatpush.msra.mxu0 0.0
        %v2004 = vand.u32 %v1984, 4294901760
        %2005 = vmatpush.msra.mxu0 %v2004
        %v2006 = vand.u32 %v1987, 4294901760
        %v2007 = vsub.f32 %v1987, %v2006
        %v2008 = vand.u32 %v2007, 4294901760
        %v2009 = vsub.f32 %v2007, %v2008
        %v2010 = vand.u32 %v2009, 4294901760
        %2011 = vmatmul.f32.gmra.mxu0 %v2010
        %v2012 = vpop.f32.mrf.mxu0
        %v2013 = vadd.f32 0.0, %v2012
        %2014 = vdwg.mxu0
        %2015 = vmatpush.msra.mxu0 0.0
        %2016 = vmatpush.msra.mxu0 0.0
        %2017 = vmatpush.msra.mxu0 0.0
        %2018 = vmatpush.msra.mxu0 0.0
        %2019 = vmatpush.msra.mxu0 0.0
        %2020 = vmatpush.msra.mxu0 0.0
        %2021 = vmatpush.msra.mxu0 0.0
        %2022 = vmatpush.msra.mxu0 0.0
        %2023 = vmatpush.msra.mxu0 0.0
        %2024 = vmatpush.msra.mxu0 0.0
        %2025 = vmatpush.msra.mxu0 0.0
        %2026 = vmatpush.msra.mxu0 0.0
        %2027 = vmatpush.msra.mxu0 0.0
        %2028 = vmatpush.msra.mxu0 0.0
        %2029 = vmatpush.msra.mxu0 0.0
        %v2030 = vand.u32 %v1984, 4294901760
        %v2031 = vsub.f32 %v1984, %v2030
        %v2032 = vand.u32 %v2031, 4294901760
        %v2033 = vsub.f32 %v2031, %v2032
        %v2034 = vand.u32 %v2033, 4294901760
        %2035 = vmatpush.msra.mxu0 %v2034
        %v2036 = vand.u32 %v1987, 4294901760
        %2037 = vmatmul.f32.gmra.mxu0 %v2036
        %v2038 = vpop.f32.mrf.mxu0
        %v2039 = vadd.f32 %v2013, %v2038
        %2040 = vdwg.mxu0
        %2041 = vmatpush.msra.mxu0 0.0
        %2042 = vmatpush.msra.mxu0 0.0
        %2043 = vmatpush.msra.mxu0 0.0
        %2044 = vmatpush.msra.mxu0 0.0
        %2045 = vmatpush.msra.mxu0 0.0
        %2046 = vmatpush.msra.mxu0 0.0
        %2047 = vmatpush.msra.mxu0 0.0
        %2048 = vmatpush.msra.mxu0 0.0
        %2049 = vmatpush.msra.mxu0 0.0
        %2050 = vmatpush.msra.mxu0 0.0
        %2051 = vmatpush.msra.mxu0 0.0
        %2052 = vmatpush.msra.mxu0 0.0
        %2053 = vmatpush.msra.mxu0 0.0
        %2054 = vmatpush.msra.mxu0 0.0
        %2055 = vmatpush.msra.mxu0 0.0
        %v2056 = vand.u32 %v1984, 4294901760
        %v2057 = vsub.f32 %v1984, %v2056
        %2058 = vmatpush.msra.mxu0 %v2057
        %v2059 = vand.u32 %v1987, 4294901760
        %v2060 = vsub.f32 %v1987, %v2059
        %2061 = vmatmul.f32.gmra.mxu0 %v2060
        %v2062 = vpop.f32.mrf.mxu0
        %v2063 = vadd.f32 %v2039, %v2062
        %2064 = vdwg.mxu0
        %2065 = vmatpush.msra.mxu0 0.0
        %2066 = vmatpush.msra.mxu0 0.0
        %2067 = vmatpush.msra.mxu0 0.0
        %2068 = vmatpush.msra.mxu0 0.0
        %2069 = vmatpush.msra.mxu0 0.0
        %2070 = vmatpush.msra.mxu0 0.0
        %2071 = vmatpush.msra.mxu0 0.0
        %2072 = vmatpush.msra.mxu0 0.0
        %2073 = vmatpush.msra.mxu0 0.0
        %2074 = vmatpush.msra.mxu0 0.0
        %2075 = vmatpush.msra.mxu0 0.0
        %2076 = vmatpush.msra.mxu0 0.0
        %2077 = vmatpush.msra.mxu0 0.0
        %2078 = vmatpush.msra.mxu0 0.0
        %2079 = vmatpush.msra.mxu0 0.0
        %v2080 = vand.u32 %v1984, 4294901760
        %2081 = vmatpush.msra.mxu0 %v2080
        %v2082 = vand.u32 %v1987, 4294901760
        %v2083 = vsub.f32 %v1987, %v2082
        %v2084 = vand.u32 %v2083, 4294901760
        %2085 = vmatmul.f32.gmra.mxu0 %v2084
        %v2086 = vpop.f32.mrf.mxu0
        %v2087 = vadd.f32 %v2063, %v2086
        %2088 = vdwg.mxu0
        %2089 = vmatpush.msra.mxu0 0.0
        %2090 = vmatpush.msra.mxu0 0.0
        %2091 = vmatpush.msra.mxu0 0.0
        %2092 = vmatpush.msra.mxu0 0.0
        %2093 = vmatpush.msra.mxu0 0.0
        %2094 = vmatpush.msra.mxu0 0.0
        %2095 = vmatpush.msra.mxu0 0.0
        %2096 = vmatpush.msra.mxu0 0.0
        %2097 = vmatpush.msra.mxu0 0.0
        %2098 = vmatpush.msra.mxu0 0.0
        %2099 = vmatpush.msra.mxu0 0.0
        %2100 = vmatpush.msra.mxu0 0.0
        %2101 = vmatpush.msra.mxu0 0.0
        %2102 = vmatpush.msra.mxu0 0.0
        %2103 = vmatpush.msra.mxu0 0.0
        %v2104 = vand.u32 %v1984, 4294901760
        %v2105 = vsub.f32 %v1984, %v2104
        %v2106 = vand.u32 %v2105, 4294901760
        %2107 = vmatpush.msra.mxu0 %v2106
        %v2108 = vand.u32 %v1987, 4294901760
        %2109 = vmatmul.f32.gmra.mxu0 %v2108
        %v2110 = vpop.f32.mrf.mxu0
        %v2111 = vadd.f32 %v2087, %v2110
        %2112 = vdwg.mxu0
        %2113 = vmatpush.msra.mxu0 0.0
        %2114 = vmatpush.msra.mxu0 0.0
        %2115 = vmatpush.msra.mxu0 0.0
        %2116 = vmatpush.msra.mxu0 0.0
        %2117 = vmatpush.msra.mxu0 0.0
        %2118 = vmatpush.msra.mxu0 0.0
        %2119 = vmatpush.msra.mxu0 0.0
        %2120 = vmatpush.msra.mxu0 0.0
        %2121 = vmatpush.msra.mxu0 0.0
        %2122 = vmatpush.msra.mxu0 0.0
        %2123 = vmatpush.msra.mxu0 0.0
        %2124 = vmatpush.msra.mxu0 0.0
        %2125 = vmatpush.msra.mxu0 0.0
        %2126 = vmatpush.msra.mxu0 0.0
        %2127 = vmatpush.msra.mxu0 0.0
        %v2128 = vand.u32 %v1984, 4294901760
        %2129 = vmatpush.msra.mxu0 %v2128
        %v2130 = vand.u32 %v1987, 4294901760
        %2131 = vmatmul.f32.gmra.mxu0 %v2130
        %v2132 = vpop.f32.mrf.mxu0
        %v2133 = vadd.f32 %v2111, %v2132
        %2134 = vdwg.mxu0
        %v2135 = vadd.f32 %v1980, %v2133
        %2137 = vset.pattern.permute.xlu0 0
        %2138 = vperm.xlu0 %2137, %v1357
        %v2139 = vpop.permute.xlu0 %2138
        %v2141 = vadd.f32 %v2135, %v2139
        %v2142 = vld [vmem:[%s8] sm:$0xff]
        %v2143 = vld [vmem:[%s9] sm:$0xff]
        %v2144 = vsel %vm1282, %v2141, 0.0
        %2145 = vadd.xlane.f32.xlu0 %v2144
        %v2146 = vpop.xlane.xlu0 %2145
        %v2147 = vmul.f32 %v2146, %v1292
        %v2148 = vsub.f32 %v2141, %v2147
        %v2149 = vmul.f32 %v2148, %v2148
        %v2150 = vsel %vm1282, %v2149, 0.0
        %2151 = vadd.xlane.f32.xlu0 %v2150
        %v2152 = vpop.xlane.xlu0 %2151
        %v2153 = vmul.f32 %v2152, %v1292
        %v2154 = vadd.f32 %v2153, 1e-05
        %v2155 = vrsqrt.pop %v2154
        %v2156 = vmul.f32 %v2155, %v2154
        %v2157 = vmul.f32 %v2156, %v2155
        %v2158 = vmul.f32 0.5, %v2157
        %v2159 = vsub.f32 1.5, %v2158
        %v2160 = vmul.f32 %v2155, %v2159
        %v2161 = vmul.f32 %v2154, %v2160
        %vm2162 = vcmp.eq.f32.partialorder %v2154, inf
        %v2163 = vsel %vm2162, %v2154, %v2161
        %vm2164 = vcmp.eq.f32.partialorder %v2154, 0.0
        %v2165 = vand.u32 %v2154, 2147483648
        %v2166 = vsel %vm2164, %v2165, %v2163
        %v2167 = vrcp.pop %v2166
        %v2168 = vmul.f32 %v2166, %v2167
        %v2169 = vsub.f32 1.0, %v2168
        %v2170 = vmul.f32 %v2167, %v2169
        %v2171 = vadd.f32 %v2167, %v2170
        %vm2172 = vweird.f32 %v2166
        %vm2173 = vweird.f32 %v2167
        %vm2174 = vmor %vm2172, %vm2173
        %v2175 = vsel %vm2174, %v2167, %v2171
        %v2176 = vand.u32 2147483647, %v2166
        %vm2177 = vcmp.eq.f32.partialorder %v2176, 8.507059e+37
        %v2178 = vand.u32 %v2166, 2147483648
        %v2179 = vor.u32 1.1754944e-38, %v2178
        %v2180 = vsel %vm2177, %v2179, %v2175
        %v2181 = vmul.f32 %v2148, %v2180
        %2183 = vset.pattern.permute.xlu0 0
        %2184 = vperm.xlu0 %2183, %v2142
        %v2185 = vpop.permute.xlu0 %2184
        %v2187 = vmul.f32 %v2181, %v2185
        %2189 = vset.pattern.permute.xlu0 0
        %2190 = vperm.xlu0 %2189, %v2143
        %v2191 = vpop.permute.xlu0 %2190
        %v2193 = vadd.f32 %v2187, %v2191
        %v2194 = vmax.f32 %v2193, 0.0
        %v2195 = vand.u32 2147483647, %v2193
        %v2196 = vsub.f32 0.0, %v2195
        %v2197 = vmul.f32 %v2196, 1.442695
        %v2198 = vpow.pop %v2197
        %v2199 = vadd.f32 %v2198, 1.0
        %v2200 = vlog2.pop %v2199
        %v2201 = vmul.f32 %v2200, 0.6931472
        %v2202 = vadd.f32 %v2194, %v2201
        %v2203 = vtanh.pop %v2202
        %v2204 = vmul.f32 %v2193, %v2203
        %v2205 = vld [vmem:[%s12] sm:$0xff]
        %v2206 = vld [vmem:[%s13] sm:$0xff]
        %2208 = vset.pattern.permute.xlu0 0
        %2209 = vperm.xlu0 %2208, %v2206
        %v2210 = vpop.permute.xlu0 %2209
        %v2213 = vsel %vm502, %v2205, 0
        %v2215 = vsel %vm506, %v465, 0
        %2217 = vmatpush.msra.mxu0 0.0
        %2218 = vmatpush.msra.mxu0 0.0
        %2219 = vmatpush.msra.mxu0 0.0
        %2220 = vmatpush.msra.mxu0 0.0
        %2221 = vmatpush.msra.mxu0 0.0
        %2222 = vmatpush.msra.mxu0 0.0
        %2223 = vmatpush.msra.mxu0 0.0
        %2224 = vmatpush.msra.mxu0 0.0
        %2225 = vmatpush.msra.mxu0 0.0
        %2226 = vmatpush.msra.mxu0 0.0
        %2227 = vmatpush.msra.mxu0 0.0
        %2228 = vmatpush.msra.mxu0 0.0
        %2229 = vmatpush.msra.mxu0 0.0
        %2230 = vmatpush.msra.mxu0 0.0
        %2231 = vmatpush.msra.mxu0 0.0
        %v2232 = vand.u32 %v2215, 4294901760
        %2233 = vmatpush.msra.mxu0 %v2232
        %v2234 = vand.u32 %v2213, 4294901760
        %v2235 = vsub.f32 %v2213, %v2234
        %v2236 = vand.u32 %v2235, 4294901760
        %v2237 = vsub.f32 %v2235, %v2236
        %v2238 = vand.u32 %v2237, 4294901760
        %2239 = vmatmul.f32.gmra.mxu0 %v2238
        %v2240 = vpop.f32.mrf.mxu0
        %v2241 = vadd.f32 %v2210, %v2240
        %2242 = vdwg.mxu0
        %2243 = vmatpush.msra.mxu0 0.0
        %2244 = vmatpush.msra.mxu0 0.0
        %2245 = vmatpush.msra.mxu0 0.0
        %2246 = vmatpush.msra.mxu0 0.0
        %2247 = vmatpush.msra.mxu0 0.0
        %2248 = vmatpush.msra.mxu0 0.0
        %2249 = vmatpush.msra.mxu0 0.0
        %2250 = vmatpush.msra.mxu0 0.0
        %2251 = vmatpush.msra.mxu0 0.0
        %2252 = vmatpush.msra.mxu0 0.0
        %2253 = vmatpush.msra.mxu0 0.0
        %2254 = vmatpush.msra.mxu0 0.0
        %2255 = vmatpush.msra.mxu0 0.0
        %2256 = vmatpush.msra.mxu0 0.0
        %2257 = vmatpush.msra.mxu0 0.0
        %v2258 = vand.u32 %v2215, 4294901760
        %v2259 = vsub.f32 %v2215, %v2258
        %v2260 = vand.u32 %v2259, 4294901760
        %v2261 = vsub.f32 %v2259, %v2260
        %v2262 = vand.u32 %v2261, 4294901760
        %2263 = vmatpush.msra.mxu0 %v2262
        %v2264 = vand.u32 %v2213, 4294901760
        %2265 = vmatmul.f32.gmra.mxu0 %v2264
        %v2266 = vpop.f32.mrf.mxu0
        %v2267 = vadd.f32 %v2241, %v2266
        %2268 = vdwg.mxu0
        %2269 = vmatpush.msra.mxu0 0.0
        %2270 = vmatpush.msra.mxu0 0.0
        %2271 = vmatpush.msra.mxu0 0.0
        %2272 = vmatpush.msra.mxu0 0.0
        %2273 = vmatpush.msra.mxu0 0.0
        %2274 = vmatpush.msra.mxu0 0.0
        %2275 = vmatpush.msra.mxu0 0.0
        %2276 = vmatpush.msra.mxu0 0.0
        %2277 = vmatpush.msra.mxu0 0.0
        %2278 = vmatpush.msra.mxu0 0.0
        %2279 = vmatpush.msra.mxu0 0.0
        %2280 = vmatpush.msra.mxu0 0.0
        %2281 = vmatpush.msra.mxu0 0.0
        %2282 = vmatpush.msra.mxu0 0.0
        %2283 = vmatpush.msra.mxu0 0.0
        %v2284 = vand.u32 %v2215, 4294901760
        %v2285 = vsub.f32 %v2215, %v2284
        %2286 = vmatpush.msra.mxu0 %v2285
        %v2287 = vand.u32 %v2213, 4294901760
        %v2288 = vsub.f32 %v2213, %v2287
        %2289 = vmatmul.f32.gmra.mxu0 %v2288
        %v2290 = vpop.f32.mrf.mxu0
        %v2291 = vadd.f32 %v2267, %v2290
        %2292 = vdwg.mxu0
        %2293 = vmatpush.msra.mxu0 0.0
        %2294 = vmatpush.msra.mxu0 0.0
        %2295 = vmatpush.msra.mxu0 0.0
        %2296 = vmatpush.msra.mxu0 0.0
        %2297 = vmatpush.msra.mxu0 0.0
        %2298 = vmatpush.msra.mxu0 0.0
        %2299 = vmatpush.msra.mxu0 0.0
        %2300 = vmatpush.msra.mxu0 0.0
        %2301 = vmatpush.msra.mxu0 0.0
        %2302 = vmatpush.msra.mxu0 0.0
        %2303 = vmatpush.msra.mxu0 0.0
        %2304 = vmatpush.msra.mxu0 0.0
        %2305 = vmatpush.msra.mxu0 0.0
        %2306 = vmatpush.msra.mxu0 0.0
        %2307 = vmatpush.msra.mxu0 0.0
        %v2308 = vand.u32 %v2215, 4294901760
        %2309 = vmatpush.msra.mxu0 %v2308
        %v2310 = vand.u32 %v2213, 4294901760
        %v2311 = vsub.f32 %v2213, %v2310
        %v2312 = vand.u32 %v2311, 4294901760
        %2313 = vmatmul.f32.gmra.mxu0 %v2312
        %v2314 = vpop.f32.mrf.mxu0
        %v2315 = vadd.f32 %v2291, %v2314
        %2316 = vdwg.mxu0
        %2317 = vmatpush.msra.mxu0 0.0
        %2318 = vmatpush.msra.mxu0 0.0
        %2319 = vmatpush.msra.mxu0 0.0
        %2320 = vmatpush.msra.mxu0 0.0
        %2321 = vmatpush.msra.mxu0 0.0
        %2322 = vmatpush.msra.mxu0 0.0
        %2323 = vmatpush.msra.mxu0 0.0
        %2324 = vmatpush.msra.mxu0 0.0
        %2325 = vmatpush.msra.mxu0 0.0
        %2326 = vmatpush.msra.mxu0 0.0
        %2327 = vmatpush.msra.mxu0 0.0
        %2328 = vmatpush.msra.mxu0 0.0
        %2329 = vmatpush.msra.mxu0 0.0
        %2330 = vmatpush.msra.mxu0 0.0
        %2331 = vmatpush.msra.mxu0 0.0
        %v2332 = vand.u32 %v2215, 4294901760
        %v2333 = vsub.f32 %v2215, %v2332
        %v2334 = vand.u32 %v2333, 4294901760
        %2335 = vmatpush.msra.mxu0 %v2334
        %v2336 = vand.u32 %v2213, 4294901760
        %2337 = vmatmul.f32.gmra.mxu0 %v2336
        %v2338 = vpop.f32.mrf.mxu0
        %v2339 = vadd.f32 %v2315, %v2338
        %2340 = vdwg.mxu0
        %2341 = vmatpush.msra.mxu0 0.0
        %2342 = vmatpush.msra.mxu0 0.0
        %2343 = vmatpush.msra.mxu0 0.0
        %2344 = vmatpush.msra.mxu0 0.0
        %2345 = vmatpush.msra.mxu0 0.0
        %2346 = vmatpush.msra.mxu0 0.0
        %2347 = vmatpush.msra.mxu0 0.0
        %2348 = vmatpush.msra.mxu0 0.0
        %2349 = vmatpush.msra.mxu0 0.0
        %2350 = vmatpush.msra.mxu0 0.0
        %2351 = vmatpush.msra.mxu0 0.0
        %2352 = vmatpush.msra.mxu0 0.0
        %2353 = vmatpush.msra.mxu0 0.0
        %2354 = vmatpush.msra.mxu0 0.0
        %2355 = vmatpush.msra.mxu0 0.0
        %v2356 = vand.u32 %v2215, 4294901760
        %2357 = vmatpush.msra.mxu0 %v2356
        %v2358 = vand.u32 %v2213, 4294901760
        %2359 = vmatmul.f32.gmra.mxu0 %v2358
        %v2360 = vpop.f32.mrf.mxu0
        %v2361 = vadd.f32 %v2339, %v2360
        %2362 = vdwg.mxu0
        %v2363 = vadd.f32 %v2204, %v2361
        %2364 = vst.msk [vmem:[%s458] sm:$0xff] %vm1282, %v2363
        %s2365 = sand.u32 %s335, 1
        %s2366 = scalar_lea.sflag [#allocation4], %s2365
        %s2367 = sand.u32 %s335, 1
        %s2368 = smul.addr %s2367, 8
        %s2369 = scalar_lea.vmem [#allocation3], %s2368
        // Predicated region
        $region77: #{tpu_custom_call.1} parent=75 // pred_check
          %p2370 = pneg %p345
        $region78: #{tpu_custom_call.1} parent=75 // pred_check_branch
          %2372 = sbr.rel (%p2370) target = $region80
        $region79: #{tpu_custom_call.1} parent=75 // pred_region
          %2374 = vsyncadd %s2366, 0
          %s2375 = smul.addr %s28, 8
          %s2376 = scalar_lea.hbm %s14, %s2375
          %s2378 = sshll.u32 %s2369, 4
          %s2379 = int_to_ptr.vmem [resolvable:$true] %s2378
          %s2380 = sshll.u32 %s2376, 4
          %s2381 = int_to_ptr.hbm [resolvable:$true] %s2380
          %2383 = dma.vmem_to_hbm [thread:$0]  %s2379, 128, %s2381, %s2366
        $region80: #{tpu_custom_call.1} parent=75 // pred_fallthru
          _
      $region76: #{tpu_custom_call.1} parent=5 // pred_fallthru
        _
      %p2384 = scmp.le.s32.totalorder 2, %s23
      // Predicated region
      $region81: #{tpu_custom_call.1} parent=5 // pred_check
        %p2385 = pneg %p2384
      $region82: #{tpu_custom_call.1} parent=5 // pred_check_branch
        %2387 = sbr.rel (%p2385) target = $region84
      $region83: #{tpu_custom_call.1} parent=5 // pred_region
        %s2388 = ssub.s32 %s23, 2
        // Predicated region
        $region85: #{tpu_custom_call.1} parent=83 // pred_check
          %p2389 = pneg %p351
        $region86: #{tpu_custom_call.1} parent=83 // pred_check_branch
          %2391 = sbr.rel (%p2389) target = $region88
        $region87: #{tpu_custom_call.1} parent=83 // pred_region
          %s2392 = sand.u32 %s336, 1
          %s2393 = scalar_lea.sflag [#allocation4], %s2392
          %s2394 = sand.u32 %s336, 1
          %s2395 = smul.addr %s2394, 8
          %s2396 = scalar_lea.vmem [#allocation3], %s2395
          %2398 = dma.done %s2393, 128
        $region88: #{tpu_custom_call.1} parent=83 // pred_fallthru
          _
      $region84: #{tpu_custom_call.1} parent=5 // pred_fallthru
        _
    $region6: #{tpu_custom_call.1} parent=1 // loop_footer
      %s27 = sadd.s32 1, %s23
    $region7: #{tpu_custom_call.1} parent=1 // loop_footer_branch
      %22 = sbr.rel target = $region3
    $region8: #{tpu_custom_call.1} parent=1 // loop_exit
      _
    %2399 = vsyncpa [#allocation4], 1
    %s2400 = scalar_lea.sflag [#allocation4], 1
    %2401 = vsyncpa %s2400, 1

</llo_original>
